<compile_context>
chip_gen: v7x
topology: tpu7x:2x2x1
jax: 0.10.0
libtpu: 0.0.40
codegen_flags: <defaults>
</compile_context>

<pallas_src>
import functools

import jax
import jax.numpy as jnp
from jax.experimental import pallas as pl
from jax.experimental.pallas import tpu as pltpu

BN_EPS = 1e-5
_CPAD = 8          # channel padding (sublane multiple) used for both conv layers
_TM_TARGET = 1024  # target lane-tile size (sweepable 512..2048)


def _ceil(a, b):
    return -(-a // b)


# ---------------------------------------------------------------------------
# Conv + BN + ReLU + 2x2-maxpool kernel (lane-dense, in-kernel im2col, one matmul)
# ---------------------------------------------------------------------------
def _conv_bn_relu_pool_kernel(x0_ref, x1_ref, w_ref, b_ref, o_ref, xall_ref, *,
                              kh, kw, wp, tm, cw):
    """One M-tile of: conv (stacked im2col matmul) -> +bias -> ReLU -> 2x2 pool.

    x0_ref : (8, tm) bf16      current tile of the flat channel-major input
    x1_ref : (8, HW) bf16      narrow halo block starting right after the tile
    w_ref  : (8, K)  bf16      folded (BN-scaled) weights, K = taps_padded * 8
    b_ref  : (8, 1)  f32       per-channel bias with BN shift folded in
    o_ref  : (8, tm) bf16      pooled values anchored at every flat position
    xall_ref: (K, cw) bf16     VMEM scratch: stacked shifted windows (im2col)
    """
    xcat = jnp.concatenate([x0_ref[...], x1_ref[...]], axis=1)   # (8, tm+HW) bf16

    # Build every tap's shifted window; the big row shift (di*wp) is shared
    # across the kw column taps, the per-column shifts are 0..kw-1 lanes.
    wins = []
    for di in range(kh):
        row = xcat[:, di * wp: di * wp + cw + kw - 1]
        for dj in range(kw):
            wins.append(row[:, dj: dj + cw])
    if len(wins) % 2:                         # pad to an even tap count so every
        wins.append(jnp.zeros_like(wins[0]))  # staging store is 16-row aligned

    # Stage the (K, cw) im2col block with aligned 16-row bf16 stores.
    for p in range(len(wins) // 2):
        xall_ref[pl.ds(p * 16, 16), :] = jnp.concatenate(wins[2 * p: 2 * p + 2],
                                                         axis=0)

    # Single stacked matmul over K = taps*channels; f32 accumulation on the MXU.
    acc = jnp.dot(w_ref[...], xall_ref[...], preferred_element_type=jnp.float32)
    y = jnp.maximum(acc + b_ref[...], 0.0)                 # folded BN + ReLU

    # Fused 2x2 max pool: column-pair max, then row-pair max (2 ops, not 3).
    m1 = jnp.maximum(y[:, :tm + wp], y[:, 1:tm + wp + 1])
    o_ref[...] = jnp.maximum(m1[:, :tm], m1[:, wp:wp + tm]).astype(o_ref.dtype)


def conv_bn_relu_pool(x_cnhw, w, b, gamma, beta, mean, var, pad):
    """Conv2d -> BatchNorm2d(inference) -> ReLU -> MaxPool2d(2,2) as one pallas_call.

    x_cnhw: (8, N, H, W) channel-major activations (channels >= Cin may be junk,
            they are multiplied by zero-padded weights).
    Returns (8, N, Ho//2, Wo//2) channel-major bf16.
    """
    Cout, Cin, kh, kw = w.shape
    Cp, N, H, W = x_cnhw.shape
    assert Cp == _CPAD and Cin <= _CPAD and Cout <= _CPAD
    Hp, Wp = H + 2 * pad, W + 2 * pad
    Ho, Wo = Hp - kh + 1, Wp - kw + 1
    Hq, Wq = Ho // 2, Wo // 2

    T = kh * kw
    Tp = T + (T % 2)                       # even tap count for aligned staging
    KK = Tp * _CPAD
    off_max = (kh - 1) * Wp + (kw - 1)
    h_need = off_max + Wp + 1              # extra input lanes needed past the tile
    HW = 128 * _ceil(h_need, 128)          # narrow halo block width

    L = N * Hp * Wp
    tm = HW * _ceil(_TM_TARGET, HW)        # tile: multiple of HW, ~_TM_TARGET lanes
    if _ceil(L, tm) < 2:                   # keep >=2 grid steps (v7x dual-TC)
        tm = max(HW, HW * _ceil(_ceil(L, 2), HW))
    nt = _ceil(L, tm)
    cw = tm + Wp + 1                       # conv width computed per tile (pool halo)

    # Fold BN scale into the weights; conv bias + BN shift into a single bias.
    s = gamma / jnp.sqrt(var + BN_EPS)
    bias = jnp.pad((b - mean) * s + beta, (0, _CPAD - Cout))
    bias = bias.reshape(_CPAD, 1).astype(jnp.float32)
    wt = jnp.transpose(w * s[:, None, None, None], (2, 3, 0, 1))
    wt = wt.reshape(T, Cout, Cin)
    wt = jnp.pad(wt, ((0, Tp - T), (0, _CPAD - Cout), (0, _CPAD - Cin)))
    w_all = jnp.transpose(wt, (1, 0, 2)).reshape(_CPAD, KK).astype(jnp.bfloat16)

    # Flat channel-major input over the zero-padded (N, Hp, Wp) grid; bf16 for MXU.
    xf = jnp.pad(x_cnhw.astype(jnp.bfloat16),
                 ((0, 0), (0, 0), (pad, pad), (pad, pad))).reshape(_CPAD, L)
    xf = jnp.pad(xf, ((0, 0), (0, (nt + 1) * tm - L)))   # covers last halo block

    kernel = functools.partial(_conv_bn_relu_pool_kernel,
                               kh=kh, kw=kw, wp=Wp, tm=tm, cw=cw)
    hs = tm // HW                                         # halo blocks per tile
    out = pl.pallas_call(
        kernel,
        out_shape=jax.ShapeDtypeStruct((_CPAD, nt * tm), jnp.bfloat16),
        grid=(nt,),
        in_specs=[
            pl.BlockSpec((_CPAD, tm), lambda i: (0, i)),            # tile i
            pl.BlockSpec((_CPAD, HW), lambda i: (0, (i + 1) * hs)),  # narrow halo
            pl.BlockSpec((_CPAD, KK), lambda i: (0, 0)),            # folded weights
            pl.BlockSpec((_CPAD, 1), lambda i: (0, 0)),             # folded bias
        ],
        out_specs=pl.BlockSpec((_CPAD, tm), lambda i: (0, i)),
        scratch_shapes=[pltpu.VMEM((KK, cw), jnp.bfloat16)],
        compiler_params=pltpu.CompilerParams(
            dimension_semantics=("parallel",),
            vmem_limit_bytes=32 * 1024 * 1024),
    )(xf, xf, w_all, bias)

    # Keep pooled values anchored at valid (even-h, even-w) conv output positions.
    out = out[:, :L].reshape(_CPAD, N, Hp, Wp)
    return out[:, :, 0:2 * Hq:2, 0:2 * Wq:2]


# ---------------------------------------------------------------------------
# Fused FC head: fc1 -> ReLU -> BN -> fc2 -> ReLU -> BN -> fc3 in one kernel
# ---------------------------------------------------------------------------
def _fc_stack_kernel(x_ref, w1_ref, b1_ref, s1_ref, t1_ref,
                     w2_ref, b2_ref, s2_ref, t2_ref, w3_ref, b3_ref, o_ref):
    h = jnp.dot(x_ref[...], w1_ref[...], preferred_element_type=jnp.float32)
    h = jnp.maximum(h + b1_ref[...], 0.0) * s1_ref[...] + t1_ref[...]
    h = jnp.dot(h.astype(jnp.bfloat16), w2_ref[...],
                preferred_element_type=jnp.float32)
    h = jnp.maximum(h + b2_ref[...], 0.0) * s2_ref[...] + t2_ref[...]
    o_ref[...] = (jnp.dot(h.astype(jnp.bfloat16), w3_ref[...],
                          preferred_element_type=jnp.float32) + b3_ref[...])


def fc_stack(x, p, n_out=10):
    B, F0 = x.shape
    Bp = 8 * _ceil(B, 8)
    F0p = 128 * _ceil(F0, 128)
    F1p = 128 * _ceil(p['fc1_b'].shape[0], 128)
    F2p = 128 * _ceil(p['fc2_b'].shape[0], 128)
    F3p = 128 * _ceil(p['fc3_b'].shape[0], 128)

    def pad2(a, r, c, dt):
        return jnp.pad(a, ((0, r - a.shape[0]), (0, c - a.shape[1]))).astype(dt)

    def row(v, c):
        return jnp.pad(v, (0, c - v.shape[0])).reshape(1, c).astype(jnp.float32)

    s1 = p['bnf1_g'] / jnp.sqrt(p['bnf1_v'] + BN_EPS)
    t1 = p['bnf1_b'] - p['bnf1_m'] * s1
    s2 = p['bnf2_g'] / jnp.sqrt(p['bnf2_v'] + BN_EPS)
    t2 = p['bnf2_b'] - p['bnf2_m'] * s2

    bf = jnp.bfloat16
    args = (pad2(x, Bp, F0p, bf),
            pad2(p['fc1_w'].T, F0p, F1p, bf), row(p['fc1_b'], F1p),
            row(s1, F1p), row(t1, F1p),
            pad2(p['fc2_w'].T, F1p, F2p, bf), row(p['fc2_b'], F2p),
            row(s2, F2p), row(t2, F2p),
            pad2(p['fc3_w'].T, F2p, F3p, bf), row(p['fc3_b'], F3p))

    out = pl.pallas_call(
        _fc_stack_kernel,
        out_shape=jax.ShapeDtypeStruct((Bp, F3p), jnp.float32),
        grid=(1,),
        in_specs=[pl.BlockSpec(a.shape, lambda i: (0, 0)) for a in args],
        out_specs=pl.BlockSpec((Bp, F3p), lambda i: (0, 0)),
    )(*args)
    return out[:B, :n_out]


# ---------------------------------------------------------------------------
# Full forward
# ---------------------------------------------------------------------------
def cnn_add_forward(x, p):
    """x: (N, 1, H, W) NCHW float32 -> (N, 10)."""
    N = x.shape[0]
    # channel-major (C, N, H, W) with C padded to 8; stays in this layout end-to-end.
    xc = jnp.pad(jnp.transpose(x, (1, 0, 2, 3)),
                 ((0, _CPAD - x.shape[1]), (0, 0), (0, 0), (0, 0)))
    a = conv_bn_relu_pool(xc, p['conv0_w'], p['conv0_b'],
                          p['bn0_g'], p['bn0_b'], p['bn0_m'], p['bn0_v'], pad=1)
    a = conv_bn_relu_pool(a, p['conv1_w'], p['conv1_b'],
                          p['bn1_g'], p['bn1_b'], p['bn1_m'], p['bn1_v'], pad=0)
    a = a[:p['conv1_w'].shape[0]]            # drop padded channels before flatten
    # torch.flatten(x, 1) on NCHW == transpose back to N-major then flatten (C,H,W).
    xf = jnp.transpose(a, (1, 0, 2, 3)).reshape(N, -1)
    return fc_stack(xf, p)


# ---------------------------------------------------------------------------
# Parameters + pure-JAX reference (for the self-check)
# ---------------------------------------------------------------------------
def init_params(seed=0, shape=(18, 14)):
    ks, ps, nm = [5, 2], [1, 0], [4, 8]
    # Reproduce the module's size bookkeeping for the FC input dim.
    _x = int(((shape[0] - ks[0] + 2 * ps[0]) + 1) / 2)
    _x = int(((_x - ks[1]) + 1) / 2)
    _y = int(((shape[1] - ks[0] + 2 * ps[0]) + 1) / 2)
    _y = int(((_y - ks[1]) + 1) / 2)
    flat = nm[1] * _x * _y

    keys = iter(jax.random.split(jax.random.PRNGKey(seed), 64))
    nrm = lambda sh, sc: sc * jax.random.normal(next(keys), sh, dtype=jnp.float32)

    def bn(c):
        g = 1.0 + 0.1 * jax.random.normal(next(keys), (c,), dtype=jnp.float32)
        be = 0.1 * jax.random.normal(next(keys), (c,), dtype=jnp.float32)
        m = 0.05 * jax.random.normal(next(keys), (c,), dtype=jnp.float32)
        v = jax.random.uniform(next(keys), (c,), dtype=jnp.float32,
                               minval=0.5, maxval=1.5)
        return g, be, m, v

    p = {}
    p['conv0_w'], p['conv0_b'] = nrm((nm[0], 1, ks[0], ks[0]), 0.2), nrm((nm[0],), 0.1)
    p['bn0_g'], p['bn0_b'], p['bn0_m'], p['bn0_v'] = bn(nm[0])
    p['conv1_w'], p['conv1_b'] = nrm((nm[1], nm[0], ks[1], ks[1]), 0.2), nrm((nm[1],), 0.1)
    p['bn1_g'], p['bn1_b'], p['bn1_m'], p['bn1_v'] = bn(nm[1])
    p['fc1_w'], p['fc1_b'] = nrm((120, flat), 1.0 / jnp.sqrt(flat)), nrm((120,), 0.05)
    p['bnf1_g'], p['bnf1_b'], p['bnf1_m'], p['bnf1_v'] = bn(120)
    p['fc2_w'], p['fc2_b'] = nrm((84, 120), 1.0 / jnp.sqrt(120.0)), nrm((84,), 0.05)
    p['bnf2_g'], p['bnf2_b'], p['bnf2_m'], p['bnf2_v'] = bn(84)
    p['fc3_w'], p['fc3_b'] = nrm((10, 84), 1.0 / jnp.sqrt(84.0)), nrm((10,), 0.05)
    return p, flat


def reference_forward(x, p):
    """Pure-JAX f32 reference of the same semantics (for the correctness check)."""
    def bn(t, g, be, m, v):
        sh = [1] * t.ndim
        sh[1] = -1
        return ((t - m.reshape(sh)) / jnp.sqrt(v.reshape(sh) + BN_EPS)
                * g.reshape(sh) + be.reshape(sh))

    def conv(t, w, b, pad):
        y = jax.lax.conv_general_dilated(
            t, w, window_strides=(1, 1), padding=[(pad, pad), (pad, pad)],
            dimension_numbers=('NCHW', 'OIHW', 'NCHW'))
        return y + b[None, :, None, None]

    def pool(t):
        N, C, H, W = t.shape
        H2, W2 = H // 2, W // 2
        return t[:, :, :H2 * 2, :W2 * 2].reshape(N, C, H2, 2, W2, 2).max(axis=(3, 5))

    x = jnp.maximum(bn(conv(x, p['conv0_w'], p['conv0_b'], 1),
                       p['bn0_g'], p['bn0_b'], p['bn0_m'], p['bn0_v']), 0.0)
    x = pool(x)
    x = jnp.maximum(bn(conv(x, p['conv1_w'], p['conv1_b'], 0),
                       p['bn1_g'], p['bn1_b'], p['bn1_m'], p['bn1_v']), 0.0)
    x = pool(x)
    x = x.reshape(x.shape[0], -1)
    x = bn(jnp.maximum(x @ p['fc1_w'].T + p['fc1_b'], 0.0),
           p['bnf1_g'], p['bnf1_b'], p['bnf1_m'], p['bnf1_v'])
    x = bn(jnp.maximum(x @ p['fc2_w'].T + p['fc2_b'], 0.0),
           p['bnf2_g'], p['bnf2_b'], p['bnf2_m'], p['bnf2_v'])
    return x @ p['fc3_w'].T + p['fc3_b']


if __name__ == "__main__":
    SHAPE = (18, 14)   # small stand-in for the default (242, 13)
    BATCH = 2
    params, flat_dim = init_params(seed=0, shape=SHAPE)

    key = jax.random.PRNGKey(0)
    x = jax.random.normal(key, (BATCH, 1, SHAPE[0], SHAPE[1]), dtype=jnp.float32)

    fwd = jax.jit(cnn_add_forward)
    out = jax.block_until_ready(fwd(x, params))
    ref = jax.block_until_ready(reference_forward(x, params))

    assert out.shape == (BATCH, 10), out.shape
    assert bool(jnp.all(jnp.isfinite(out)))
    # bf16 conv + bf16 FC weights/activations (f32 accumulation) vs f32 reference:
    # small, documented numerical drift is expected.
    err = float(jnp.max(jnp.abs(out - ref)))
    assert bool(jnp.allclose(out, ref, atol=1e-1, rtol=5e-2)), err
    print("KERNEL_OK")
</pallas_src>

<mosaic_0001>
module attributes {stable_mosaic.version = 11 : i64} {
  func.func @_conv_bn_relu_pool_kernel(%arg0: i32, %arg1: memref<8x384xbf16, #tpu.memory_space<vmem>>, %arg2: memref<8x128xbf16, #tpu.memory_space<vmem>>, %arg3: memref<8x208xbf16, #tpu.memory_space<vmem>>, %arg4: memref<8x1xf32, #tpu.memory_space<vmem>>, %arg5: memref<8x384xbf16, #tpu.memory_space<vmem>>, %arg6: memref<208x401xbf16, #tpu.memory_space<vmem>>) attributes {dimension_semantics = [#tpu.dimension_semantics<parallel>], iteration_bounds = array<i64: 2>, scalar_prefetch = 0 : i64, scratch_operands = 1 : i64, tpu.core_type = #tpu.core_type<tc>, window_params = [{transform_indices = @transform_0, window_bounds = array<i64: 8, 384>}, {transform_indices = @transform_1, window_bounds = array<i64: 8, 128>}, {pipeline_mode = #tpu.pipeline_mode<synchronous>, transform_indices = @transform_2, window_bounds = array<i64: 8, 208>}, {pipeline_mode = #tpu.pipeline_mode<synchronous>, transform_indices = @transform_3, window_bounds = array<i64: 8, 1>}, {transform_indices = @transform_4, window_bounds = array<i64: 8, 384>}]} {
    %c0 = arith.constant 0 : index
    %c0_0 = arith.constant 0 : index
    %0 = vector.load %arg1[%c0, %c0_0] : memref<8x384xbf16, #tpu.memory_space<vmem>>, vector<8x384xbf16>
    %c0_1 = arith.constant 0 : index
    %c0_2 = arith.constant 0 : index
    %1 = vector.load %arg2[%c0_1, %c0_2] : memref<8x128xbf16, #tpu.memory_space<vmem>>, vector<8x128xbf16>
    %2 = tpu.concatenate %0, %1 in 1 : vector<8x384xbf16>, vector<8x128xbf16> -> vector<8x512xbf16>
    %3 = vector.extract_strided_slice %2 {offsets = [0, 0], sizes = [8, 405], strides = [1, 1]} : vector<8x512xbf16> to vector<8x405xbf16>
    %4 = vector.extract_strided_slice %3 {offsets = [0, 0], sizes = [8, 401], strides = [1, 1]} : vector<8x405xbf16> to vector<8x401xbf16>
    %5 = vector.extract_strided_slice %3 {offsets = [0, 1], sizes = [8, 401], strides = [1, 1]} : vector<8x405xbf16> to vector<8x401xbf16>
    %6 = vector.extract_strided_slice %3 {offsets = [0, 2], sizes = [8, 401], strides = [1, 1]} : vector<8x405xbf16> to vector<8x401xbf16>
    %7 = vector.extract_strided_slice %3 {offsets = [0, 3], sizes = [8, 401], strides = [1, 1]} : vector<8x405xbf16> to vector<8x401xbf16>
    %8 = vector.extract_strided_slice %3 {offsets = [0, 4], sizes = [8, 401], strides = [1, 1]} : vector<8x405xbf16> to vector<8x401xbf16>
    %9 = vector.extract_strided_slice %2 {offsets = [0, 16], sizes = [8, 405], strides = [1, 1]} : vector<8x512xbf16> to vector<8x405xbf16>
    %10 = vector.extract_strided_slice %9 {offsets = [0, 0], sizes = [8, 401], strides = [1, 1]} : vector<8x405xbf16> to vector<8x401xbf16>
    %11 = vector.extract_strided_slice %9 {offsets = [0, 1], sizes = [8, 401], strides = [1, 1]} : vector<8x405xbf16> to vector<8x401xbf16>
    %12 = vector.extract_strided_slice %9 {offsets = [0, 2], sizes = [8, 401], strides = [1, 1]} : vector<8x405xbf16> to vector<8x401xbf16>
    %13 = vector.extract_strided_slice %9 {offsets = [0, 3], sizes = [8, 401], strides = [1, 1]} : vector<8x405xbf16> to vector<8x401xbf16>
    %14 = vector.extract_strided_slice %9 {offsets = [0, 4], sizes = [8, 401], strides = [1, 1]} : vector<8x405xbf16> to vector<8x401xbf16>
    %15 = vector.extract_strided_slice %2 {offsets = [0, 32], sizes = [8, 405], strides = [1, 1]} : vector<8x512xbf16> to vector<8x405xbf16>
    %16 = vector.extract_strided_slice %15 {offsets = [0, 0], sizes = [8, 401], strides = [1, 1]} : vector<8x405xbf16> to vector<8x401xbf16>
    %17 = vector.extract_strided_slice %15 {offsets = [0, 1], sizes = [8, 401], strides = [1, 1]} : vector<8x405xbf16> to vector<8x401xbf16>
    %18 = vector.extract_strided_slice %15 {offsets = [0, 2], sizes = [8, 401], strides = [1, 1]} : vector<8x405xbf16> to vector<8x401xbf16>
    %19 = vector.extract_strided_slice %15 {offsets = [0, 3], sizes = [8, 401], strides = [1, 1]} : vector<8x405xbf16> to vector<8x401xbf16>
    %20 = vector.extract_strided_slice %15 {offsets = [0, 4], sizes = [8, 401], strides = [1, 1]} : vector<8x405xbf16> to vector<8x401xbf16>
    %21 = vector.extract_strided_slice %2 {offsets = [0, 48], sizes = [8, 405], strides = [1, 1]} : vector<8x512xbf16> to vector<8x405xbf16>
    %22 = vector.extract_strided_slice %21 {offsets = [0, 0], sizes = [8, 401], strides = [1, 1]} : vector<8x405xbf16> to vector<8x401xbf16>
    %23 = vector.extract_strided_slice %21 {offsets = [0, 1], sizes = [8, 401], strides = [1, 1]} : vector<8x405xbf16> to vector<8x401xbf16>
    %24 = vector.extract_strided_slice %21 {offsets = [0, 2], sizes = [8, 401], strides = [1, 1]} : vector<8x405xbf16> to vector<8x401xbf16>
    %25 = vector.extract_strided_slice %21 {offsets = [0, 3], sizes = [8, 401], strides = [1, 1]} : vector<8x405xbf16> to vector<8x401xbf16>
    %26 = vector.extract_strided_slice %21 {offsets = [0, 4], sizes = [8, 401], strides = [1, 1]} : vector<8x405xbf16> to vector<8x401xbf16>
    %27 = vector.extract_strided_slice %2 {offsets = [0, 64], sizes = [8, 405], strides = [1, 1]} : vector<8x512xbf16> to vector<8x405xbf16>
    %28 = vector.extract_strided_slice %27 {offsets = [0, 0], sizes = [8, 401], strides = [1, 1]} : vector<8x405xbf16> to vector<8x401xbf16>
    %29 = vector.extract_strided_slice %27 {offsets = [0, 1], sizes = [8, 401], strides = [1, 1]} : vector<8x405xbf16> to vector<8x401xbf16>
    %30 = vector.extract_strided_slice %27 {offsets = [0, 2], sizes = [8, 401], strides = [1, 1]} : vector<8x405xbf16> to vector<8x401xbf16>
    %31 = vector.extract_strided_slice %27 {offsets = [0, 3], sizes = [8, 401], strides = [1, 1]} : vector<8x405xbf16> to vector<8x401xbf16>
    %32 = vector.extract_strided_slice %27 {offsets = [0, 4], sizes = [8, 401], strides = [1, 1]} : vector<8x405xbf16> to vector<8x401xbf16>
    %cst = arith.constant 0.000000e+00 : bf16
    %33 = vector.broadcast %cst : bf16 to vector<8x401xbf16>
    %34 = tpu.concatenate %4, %5 in 0 : vector<8x401xbf16>, vector<8x401xbf16> -> vector<16x401xbf16>
    %c0_3 = arith.constant 0 : index
    %c0_4 = arith.constant 0 : index
    %35 = vector.load %arg6[%c0_3, %c0_4] : memref<208x401xbf16, #tpu.memory_space<vmem>>, vector<16x401xbf16>
    tpu.vector_store %arg6[%c0_3, %c0_4], %34 {strides = array<i32>} : memref<208x401xbf16, #tpu.memory_space<vmem>>, vector<16x401xbf16>,
    %36 = tpu.concatenate %6, %7 in 0 : vector<8x401xbf16>, vector<8x401xbf16> -> vector<16x401xbf16>
    %c16 = arith.constant 16 : index
    %c0_5 = arith.constant 0 : index
    %37 = vector.load %arg6[%c16, %c0_5] : memref<208x401xbf16, #tpu.memory_space<vmem>>, vector<16x401xbf16>
    tpu.vector_store %arg6[%c16, %c0_5], %36 {strides = array<i32>} : memref<208x401xbf16, #tpu.memory_space<vmem>>, vector<16x401xbf16>,
    %38 = tpu.concatenate %8, %10 in 0 : vector<8x401xbf16>, vector<8x401xbf16> -> vector<16x401xbf16>
    %c32 = arith.constant 32 : index
    %c0_6 = arith.constant 0 : index
    %39 = vector.load %arg6[%c32, %c0_6] : memref<208x401xbf16, #tpu.memory_space<vmem>>, vector<16x401xbf16>
    tpu.vector_store %arg6[%c32, %c0_6], %38 {strides = array<i32>} : memref<208x401xbf16, #tpu.memory_space<vmem>>, vector<16x401xbf16>,
    %40 = tpu.concatenate %11, %12 in 0 : vector<8x401xbf16>, vector<8x401xbf16> -> vector<16x401xbf16>
    %c48 = arith.constant 48 : index
    %c0_7 = arith.constant 0 : index
    %41 = vector.load %arg6[%c48, %c0_7] : memref<208x401xbf16, #tpu.memory_space<vmem>>, vector<16x401xbf16>
    tpu.vector_store %arg6[%c48, %c0_7], %40 {strides = array<i32>} : memref<208x401xbf16, #tpu.memory_space<vmem>>, vector<16x401xbf16>,
    %42 = tpu.concatenate %13, %14 in 0 : vector<8x401xbf16>, vector<8x401xbf16> -> vector<16x401xbf16>
    %c64 = arith.constant 64 : index
    %c0_8 = arith.constant 0 : index
    %43 = vector.load %arg6[%c64, %c0_8] : memref<208x401xbf16, #tpu.memory_space<vmem>>, vector<16x401xbf16>
    tpu.vector_store %arg6[%c64, %c0_8], %42 {strides = array<i32>} : memref<208x401xbf16, #tpu.memory_space<vmem>>, vector<16x401xbf16>,
    %44 = tpu.concatenate %16, %17 in 0 : vector<8x401xbf16>, vector<8x401xbf16> -> vector<16x401xbf16>
    %c80 = arith.constant 80 : index
    %c0_9 = arith.constant 0 : index
    %45 = vector.load %arg6[%c80, %c0_9] : memref<208x401xbf16, #tpu.memory_space<vmem>>, vector<16x401xbf16>
    tpu.vector_store %arg6[%c80, %c0_9], %44 {strides = array<i32>} : memref<208x401xbf16, #tpu.memory_space<vmem>>, vector<16x401xbf16>,
    %46 = tpu.concatenate %18, %19 in 0 : vector<8x401xbf16>, vector<8x401xbf16> -> vector<16x401xbf16>
    %c96 = arith.constant 96 : index
    %c0_10 = arith.constant 0 : index
    %47 = vector.load %arg6[%c96, %c0_10] : memref<208x401xbf16, #tpu.memory_space<vmem>>, vector<16x401xbf16>
    tpu.vector_store %arg6[%c96, %c0_10], %46 {strides = array<i32>} : memref<208x401xbf16, #tpu.memory_space<vmem>>, vector<16x401xbf16>,
    %48 = tpu.concatenate %20, %22 in 0 : vector<8x401xbf16>, vector<8x401xbf16> -> vector<16x401xbf16>
    %c112 = arith.constant 112 : index
    %c0_11 = arith.constant 0 : index
    %49 = vector.load %arg6[%c112, %c0_11] : memref<208x401xbf16, #tpu.memory_space<vmem>>, vector<16x401xbf16>
    tpu.vector_store %arg6[%c112, %c0_11], %48 {strides = array<i32>} : memref<208x401xbf16, #tpu.memory_space<vmem>>, vector<16x401xbf16>,
    %50 = tpu.concatenate %23, %24 in 0 : vector<8x401xbf16>, vector<8x401xbf16> -> vector<16x401xbf16>
    %c128 = arith.constant 128 : index
    %c0_12 = arith.constant 0 : index
    %51 = vector.load %arg6[%c128, %c0_12] : memref<208x401xbf16, #tpu.memory_space<vmem>>, vector<16x401xbf16>
    tpu.vector_store %arg6[%c128, %c0_12], %50 {strides = array<i32>} : memref<208x401xbf16, #tpu.memory_space<vmem>>, vector<16x401xbf16>,
    %52 = tpu.concatenate %25, %26 in 0 : vector<8x401xbf16>, vector<8x401xbf16> -> vector<16x401xbf16>
    %c144 = arith.constant 144 : index
    %c0_13 = arith.constant 0 : index
    %53 = vector.load %arg6[%c144, %c0_13] : memref<208x401xbf16, #tpu.memory_space<vmem>>, vector<16x401xbf16>
    tpu.vector_store %arg6[%c144, %c0_13], %52 {strides = array<i32>} : memref<208x401xbf16, #tpu.memory_space<vmem>>, vector<16x401xbf16>,
    %54 = tpu.concatenate %28, %29 in 0 : vector<8x401xbf16>, vector<8x401xbf16> -> vector<16x401xbf16>
    %c160 = arith.constant 160 : index
    %c0_14 = arith.constant 0 : index
    %55 = vector.load %arg6[%c160, %c0_14] : memref<208x401xbf16, #tpu.memory_space<vmem>>, vector<16x401xbf16>
    tpu.vector_store %arg6[%c160, %c0_14], %54 {strides = array<i32>} : memref<208x401xbf16, #tpu.memory_space<vmem>>, vector<16x401xbf16>,
    %56 = tpu.concatenate %30, %31 in 0 : vector<8x401xbf16>, vector<8x401xbf16> -> vector<16x401xbf16>
    %c176 = arith.constant 176 : index
    %c0_15 = arith.constant 0 : index
    %57 = vector.load %arg6[%c176, %c0_15] : memref<208x401xbf16, #tpu.memory_space<vmem>>, vector<16x401xbf16>
    tpu.vector_store %arg6[%c176, %c0_15], %56 {strides = array<i32>} : memref<208x401xbf16, #tpu.memory_space<vmem>>, vector<16x401xbf16>,
    %58 = tpu.concatenate %32, %33 in 0 : vector<8x401xbf16>, vector<8x401xbf16> -> vector<16x401xbf16>
    %c192 = arith.constant 192 : index
    %c0_16 = arith.constant 0 : index
    %59 = vector.load %arg6[%c192, %c0_16] : memref<208x401xbf16, #tpu.memory_space<vmem>>, vector<16x401xbf16>
    tpu.vector_store %arg6[%c192, %c0_16], %58 {strides = array<i32>} : memref<208x401xbf16, #tpu.memory_space<vmem>>, vector<16x401xbf16>,
    %c0_17 = arith.constant 0 : index
    %c0_18 = arith.constant 0 : index
    %60 = vector.load %arg3[%c0_17, %c0_18] : memref<8x208xbf16, #tpu.memory_space<vmem>>, vector<8x208xbf16>
    %c0_19 = arith.constant 0 : index
    %c0_20 = arith.constant 0 : index
    %61 = vector.load %arg6[%c0_19, %c0_20] : memref<208x401xbf16, #tpu.memory_space<vmem>>, vector<208x401xbf16>
    %cst_21 = arith.constant dense<0.000000e+00> : vector<8x401xf32>
    %62 = tpu.matmul %60, %61, %cst_21 {dimension_numbers = #tpu.dot_dimension_numbers<[1], [0], [0], [1], [0, 0, 1, 1], [], []>} : vector<8x208xbf16>, vector<208x401xbf16>, vector<8x401xf32> -> vector<8x401xf32>
    %c0_22 = arith.constant 0 : index
    %c0_23 = arith.constant 0 : index
    %63 = vector.load %arg4[%c0_22, %c0_23] : memref<8x1xf32, #tpu.memory_space<vmem>>, vector<8x1xf32>
    %64 = vector.broadcast %63 : vector<8x1xf32> to vector<8x401xf32>
    %65 = arith.addf %62, %64 : vector<8x401xf32>
    %cst_24 = arith.constant 0.000000e+00 : f32
    %66 = vector.broadcast %cst_24 : f32 to vector<8x401xf32>
    %67 = arith.maximumf %65, %66 : vector<8x401xf32>
    %68 = vector.extract_strided_slice %67 {offsets = [0, 0], sizes = [8, 400], strides = [1, 1]} : vector<8x401xf32> to vector<8x400xf32>
    %69 = vector.extract_strided_slice %67 {offsets = [0, 1], sizes = [8, 400], strides = [1, 1]} : vector<8x401xf32> to vector<8x400xf32>
    %70 = arith.maximumf %68, %69 : vector<8x400xf32>
    %71 = vector.extract_strided_slice %70 {offsets = [0, 0], sizes = [8, 384], strides = [1, 1]} : vector<8x400xf32> to vector<8x384xf32>
    %72 = vector.extract_strided_slice %70 {offsets = [0, 16], sizes = [8, 384], strides = [1, 1]} : vector<8x400xf32> to vector<8x384xf32>
    %73 = arith.maximumf %71, %72 : vector<8x384xf32>
    %74 = arith.truncf %73 : vector<8x384xf32> to vector<8x384xbf16>
    %c0_25 = arith.constant 0 : index
    %c0_26 = arith.constant 0 : index
    %75 = vector.load %arg5[%c0_25, %c0_26] : memref<8x384xbf16, #tpu.memory_space<vmem>>, vector<8x384xbf16>
    tpu.vector_store %arg5[%c0_25, %c0_26], %74 {strides = array<i32>} : memref<8x384xbf16, #tpu.memory_space<vmem>>, vector<8x384xbf16>,
    return
  }
  func.func @transform_0(%arg0: i32) -> (i32, i32) {
    %c0_i32 = arith.constant 0 : i32
    %c0_i32_0 = arith.constant 0 : i32
    return %c0_i32, %arg0 : i32, i32
  }
  func.func @transform_1(%arg0: i32) -> (i32, i32) {
    %c1_i32 = arith.constant 1 : i32
    %0 = arith.addi %arg0, %c1_i32 : i32
    %c3_i32 = arith.constant 3 : i32
    %1 = arith.muli %0, %c3_i32 : i32
    %c0_i32 = arith.constant 0 : i32
    %c0_i32_0 = arith.constant 0 : i32
    return %c0_i32, %1 : i32, i32
  }
  func.func @transform_2(%arg0: i32) -> (i32, i32) {
    %c0_i32 = arith.constant 0 : i32
    %c0_i32_0 = arith.constant 0 : i32
    %c0_i32_1 = arith.constant 0 : i32
    return %c0_i32, %c0_i32_0 : i32, i32
  }
  func.func @transform_3(%arg0: i32) -> (i32, i32) {
    %c0_i32 = arith.constant 0 : i32
    %c0_i32_0 = arith.constant 0 : i32
    %c0_i32_1 = arith.constant 0 : i32
    return %c0_i32, %c0_i32_0 : i32, i32
  }
  func.func @transform_4(%arg0: i32) -> (i32, i32) {
    %c0_i32 = arith.constant 0 : i32
    %c0_i32_0 = arith.constant 0 : i32
    return %c0_i32, %arg0 : i32, i32
  }
}

module attributes {stable_mosaic.version = 11 : i64} {
  func.func @_conv_bn_relu_pool_kernel(%arg0: i32, %arg1: memref<8x128xbf16, #tpu.memory_space<vmem>>, %arg2: memref<8x128xbf16, #tpu.memory_space<vmem>>, %arg3: memref<8x32xbf16, #tpu.memory_space<vmem>>, %arg4: memref<8x1xf32, #tpu.memory_space<vmem>>, %arg5: memref<8x128xbf16, #tpu.memory_space<vmem>>, %arg6: memref<32x135xbf16, #tpu.memory_space<vmem>>) attributes {dimension_semantics = [#tpu.dimension_semantics<parallel>], iteration_bounds = array<i64: 1>, scalar_prefetch = 0 : i64, scratch_operands = 1 : i64, tpu.core_type = #tpu.core_type<tc>, window_params = [{transform_indices = @transform_0, window_bounds = array<i64: 8, 128>}, {transform_indices = @transform_1, window_bounds = array<i64: 8, 128>}, {pipeline_mode = #tpu.pipeline_mode<synchronous>, transform_indices = @transform_2, window_bounds = array<i64: 8, 32>}, {pipeline_mode = #tpu.pipeline_mode<synchronous>, transform_indices = @transform_3, window_bounds = array<i64: 8, 1>}, {transform_indices = @transform_4, window_bounds = array<i64: 8, 128>}]} {
    %c0 = arith.constant 0 : index
    %c0_0 = arith.constant 0 : index
    %0 = vector.load %arg1[%c0, %c0_0] : memref<8x128xbf16, #tpu.memory_space<vmem>>, vector<8x128xbf16>
    %c0_1 = arith.constant 0 : index
    %c0_2 = arith.constant 0 : index
    %1 = vector.load %arg2[%c0_1, %c0_2] : memref<8x128xbf16, #tpu.memory_space<vmem>>, vector<8x128xbf16>
    %2 = tpu.concatenate %0, %1 in 1 : vector<8x128xbf16>, vector<8x128xbf16> -> vector<8x256xbf16>
    %3 = vector.extract_strided_slice %2 {offsets = [0, 0], sizes = [8, 136], strides = [1, 1]} : vector<8x256xbf16> to vector<8x136xbf16>
    %4 = vector.extract_strided_slice %3 {offsets = [0, 0], sizes = [8, 135], strides = [1, 1]} : vector<8x136xbf16> to vector<8x135xbf16>
    %5 = vector.extract_strided_slice %3 {offsets = [0, 1], sizes = [8, 135], strides = [1, 1]} : vector<8x136xbf16> to vector<8x135xbf16>
    %6 = vector.extract_strided_slice %2 {offsets = [0, 6], sizes = [8, 136], strides = [1, 1]} : vector<8x256xbf16> to vector<8x136xbf16>
    %7 = vector.extract_strided_slice %6 {offsets = [0, 0], sizes = [8, 135], strides = [1, 1]} : vector<8x136xbf16> to vector<8x135xbf16>
    %8 = vector.extract_strided_slice %6 {offsets = [0, 1], sizes = [8, 135], strides = [1, 1]} : vector<8x136xbf16> to vector<8x135xbf16>
    %9 = tpu.concatenate %4, %5 in 0 : vector<8x135xbf16>, vector<8x135xbf16> -> vector<16x135xbf16>
    %c0_3 = arith.constant 0 : index
    %c0_4 = arith.constant 0 : index
    %10 = vector.load %arg6[%c0_3, %c0_4] : memref<32x135xbf16, #tpu.memory_space<vmem>>, vector<16x135xbf16>
    tpu.vector_store %arg6[%c0_3, %c0_4], %9 {strides = array<i32>} : memref<32x135xbf16, #tpu.memory_space<vmem>>, vector<16x135xbf16>,
    %11 = tpu.concatenate %7, %8 in 0 : vector<8x135xbf16>, vector<8x135xbf16> -> vector<16x135xbf16>
    %c16 = arith.constant 16 : index
    %c0_5 = arith.constant 0 : index
    %12 = vector.load %arg6[%c16, %c0_5] : memref<32x135xbf16, #tpu.memory_space<vmem>>, vector<16x135xbf16>
    tpu.vector_store %arg6[%c16, %c0_5], %11 {strides = array<i32>} : memref<32x135xbf16, #tpu.memory_space<vmem>>, vector<16x135xbf16>,
    %c0_6 = arith.constant 0 : index
    %c0_7 = arith.constant 0 : index
    %13 = vector.load %arg3[%c0_6, %c0_7] : memref<8x32xbf16, #tpu.memory_space<vmem>>, vector<8x32xbf16>
    %c0_8 = arith.constant 0 : index
    %c0_9 = arith.constant 0 : index
    %14 = vector.load %arg6[%c0_8, %c0_9] : memref<32x135xbf16, #tpu.memory_space<vmem>>, vector<32x135xbf16>
    %cst = arith.constant dense<0.000000e+00> : vector<8x135xf32>
    %15 = tpu.matmul %13, %14, %cst {dimension_numbers = #tpu.dot_dimension_numbers<[1], [0], [0], [1], [0, 0, 1, 1], [], []>} : vector<8x32xbf16>, vector<32x135xbf16>, vector<8x135xf32> -> vector<8x135xf32>
    %c0_10 = arith.constant 0 : index
    %c0_11 = arith.constant 0 : index
    %16 = vector.load %arg4[%c0_10, %c0_11] : memref<8x1xf32, #tpu.memory_space<vmem>>, vector<8x1xf32>
    %17 = vector.broadcast %16 : vector<8x1xf32> to vector<8x135xf32>
    %18 = arith.addf %15, %17 : vector<8x135xf32>
    %cst_12 = arith.constant 0.000000e+00 : f32
    %19 = vector.broadcast %cst_12 : f32 to vector<8x135xf32>
    %20 = arith.maximumf %18, %19 : vector<8x135xf32>
    %21 = vector.extract_strided_slice %20 {offsets = [0, 0], sizes = [8, 134], strides = [1, 1]} : vector<8x135xf32> to vector<8x134xf32>
    %22 = vector.extract_strided_slice %20 {offsets = [0, 1], sizes = [8, 134], strides = [1, 1]} : vector<8x135xf32> to vector<8x134xf32>
    %23 = arith.maximumf %21, %22 : vector<8x134xf32>
    %24 = vector.extract_strided_slice %23 {offsets = [0, 0], sizes = [8, 128], strides = [1, 1]} : vector<8x134xf32> to vector<8x128xf32>
    %25 = vector.extract_strided_slice %23 {offsets = [0, 6], sizes = [8, 128], strides = [1, 1]} : vector<8x134xf32> to vector<8x128xf32>
    %26 = arith.maximumf %24, %25 : vector<8x128xf32>
    %27 = arith.truncf %26 : vector<8x128xf32> to vector<8x128xbf16>
    %c0_13 = arith.constant 0 : index
    %c0_14 = arith.constant 0 : index
    %28 = vector.load %arg5[%c0_13, %c0_14] : memref<8x128xbf16, #tpu.memory_space<vmem>>, vector<8x128xbf16>
    tpu.vector_store %arg5[%c0_13, %c0_14], %27 {strides = array<i32>} : memref<8x128xbf16, #tpu.memory_space<vmem>>, vector<8x128xbf16>,
    return
  }
  func.func @transform_0(%arg0: i32) -> (i32, i32) {
    %c0_i32 = arith.constant 0 : i32
    %c0_i32_0 = arith.constant 0 : i32
    return %c0_i32, %arg0 : i32, i32
  }
  func.func @transform_1(%arg0: i32) -> (i32, i32) {
    %c1_i32 = arith.constant 1 : i32
    %0 = arith.addi %arg0, %c1_i32 : i32
    %c1_i32_0 = arith.constant 1 : i32
    %1 = arith.muli %0, %c1_i32_0 : i32
    %c0_i32 = arith.constant 0 : i32
    %c0_i32_1 = arith.constant 0 : i32
    return %c0_i32, %1 : i32, i32
  }
  func.func @transform_2(%arg0: i32) -> (i32, i32) {
    %c0_i32 = arith.constant 0 : i32
    %c0_i32_0 = arith.constant 0 : i32
    %c0_i32_1 = arith.constant 0 : i32
    return %c0_i32, %c0_i32_0 : i32, i32
  }
  func.func @transform_3(%arg0: i32) -> (i32, i32) {
    %c0_i32 = arith.constant 0 : i32
    %c0_i32_0 = arith.constant 0 : i32
    %c0_i32_1 = arith.constant 0 : i32
    return %c0_i32, %c0_i32_0 : i32, i32
  }
  func.func @transform_4(%arg0: i32) -> (i32, i32) {
    %c0_i32 = arith.constant 0 : i32
    %c0_i32_0 = arith.constant 0 : i32
    return %c0_i32, %arg0 : i32, i32
  }
}

module attributes {stable_mosaic.version = 11 : i64} {
  func.func @_fc_stack_kernel(%arg0: i32, %arg1: memref<8x128xbf16, #tpu.memory_space<vmem>>, %arg2: memref<128x128xbf16, #tpu.memory_space<vmem>>, %arg3: memref<1x128xf32, #tpu.memory_space<vmem>>, %arg4: memref<1x128xf32, #tpu.memory_space<vmem>>, %arg5: memref<1x128xf32, #tpu.memory_space<vmem>>, %arg6: memref<128x128xbf16, #tpu.memory_space<vmem>>, %arg7: memref<1x128xf32, #tpu.memory_space<vmem>>, %arg8: memref<1x128xf32, #tpu.memory_space<vmem>>, %arg9: memref<1x128xf32, #tpu.memory_space<vmem>>, %arg10: memref<128x128xbf16, #tpu.memory_space<vmem>>, %arg11: memref<1x128xf32, #tpu.memory_space<vmem>>, %arg12: memref<8x128xf32, #tpu.memory_space<vmem>>) attributes {dimension_semantics = [#tpu.dimension_semantics<arbitrary>], iteration_bounds = array<i64: 1>, scalar_prefetch = 0 : i64, scratch_operands = 0 : i64, tpu.core_type = #tpu.core_type<tc>, window_params = [{pipeline_mode = #tpu.pipeline_mode<synchronous>, transform_indices = @transform_0, window_bounds = array<i64: 8, 128>}, {pipeline_mode = #tpu.pipeline_mode<synchronous>, transform_indices = @transform_1, window_bounds = array<i64: 128, 128>}, {pipeline_mode = #tpu.pipeline_mode<synchronous>, transform_indices = @transform_2, window_bounds = array<i64: 1, 128>}, {pipeline_mode = #tpu.pipeline_mode<synchronous>, transform_indices = @transform_3, window_bounds = array<i64: 1, 128>}, {pipeline_mode = #tpu.pipeline_mode<synchronous>, transform_indices = @transform_4, window_bounds = array<i64: 1, 128>}, {pipeline_mode = #tpu.pipeline_mode<synchronous>, transform_indices = @transform_5, window_bounds = array<i64: 128, 128>}, {pipeline_mode = #tpu.pipeline_mode<synchronous>, transform_indices = @transform_6, window_bounds = array<i64: 1, 128>}, {pipeline_mode = #tpu.pipeline_mode<synchronous>, transform_indices = @transform_7, window_bounds = array<i64: 1, 128>}, {pipeline_mode = #tpu.pipeline_mode<synchronous>, transform_indices = @transform_8, window_bounds = array<i64: 1, 128>}, {pipeline_mode = #tpu.pipeline_mode<synchronous>, transform_indices = @transform_9, window_bounds = array<i64: 128, 128>}, {pipeline_mode = #tpu.pipeline_mode<synchronous>, transform_indices = @transform_10, window_bounds = array<i64: 1, 128>}, {pipeline_mode = #tpu.pipeline_mode<synchronous>, transform_indices = @transform_11, window_bounds = array<i64: 8, 128>}]} {
    %c0 = arith.constant 0 : index
    %c0_0 = arith.constant 0 : index
    %0 = vector.load %arg1[%c0, %c0_0] : memref<8x128xbf16, #tpu.memory_space<vmem>>, vector<8x128xbf16>
    %c0_1 = arith.constant 0 : index
    %c0_2 = arith.constant 0 : index
    %1 = vector.load %arg2[%c0_1, %c0_2] : memref<128x128xbf16, #tpu.memory_space<vmem>>, vector<128x128xbf16>
    %cst = arith.constant dense<0.000000e+00> : vector<8x128xf32>
    %2 = tpu.matmul %0, %1, %cst {dimension_numbers = #tpu.dot_dimension_numbers<[1], [0], [0], [1], [0, 0, 1, 1], [], []>} : vector<8x128xbf16>, vector<128x128xbf16>, vector<8x128xf32> -> vector<8x128xf32>
    %c0_3 = arith.constant 0 : index
    %c0_4 = arith.constant 0 : index
    %3 = vector.load %arg3[%c0_3, %c0_4] : memref<1x128xf32, #tpu.memory_space<vmem>>, vector<1x128xf32>
    %4 = vector.broadcast %3 : vector<1x128xf32> to vector<8x128xf32>
    %5 = arith.addf %2, %4 : vector<8x128xf32>
    %cst_5 = arith.constant 0.000000e+00 : f32
    %6 = vector.broadcast %cst_5 : f32 to vector<8x128xf32>
    %7 = arith.maximumf %5, %6 : vector<8x128xf32>
    %c0_6 = arith.constant 0 : index
    %c0_7 = arith.constant 0 : index
    %8 = vector.load %arg4[%c0_6, %c0_7] : memref<1x128xf32, #tpu.memory_space<vmem>>, vector<1x128xf32>
    %9 = vector.broadcast %8 : vector<1x128xf32> to vector<8x128xf32>
    %10 = arith.mulf %7, %9 : vector<8x128xf32>
    %c0_8 = arith.constant 0 : index
    %c0_9 = arith.constant 0 : index
    %11 = vector.load %arg5[%c0_8, %c0_9] : memref<1x128xf32, #tpu.memory_space<vmem>>, vector<1x128xf32>
    %12 = vector.broadcast %11 : vector<1x128xf32> to vector<8x128xf32>
    %13 = arith.addf %10, %12 : vector<8x128xf32>
    %14 = arith.truncf %13 : vector<8x128xf32> to vector<8x128xbf16>
    %c0_10 = arith.constant 0 : index
    %c0_11 = arith.constant 0 : index
    %15 = vector.load %arg6[%c0_10, %c0_11] : memref<128x128xbf16, #tpu.memory_space<vmem>>, vector<128x128xbf16>
    %cst_12 = arith.constant dense<0.000000e+00> : vector<8x128xf32>
    %16 = tpu.matmul %14, %15, %cst_12 {dimension_numbers = #tpu.dot_dimension_numbers<[1], [0], [0], [1], [0, 0, 1, 1], [], []>} : vector<8x128xbf16>, vector<128x128xbf16>, vector<8x128xf32> -> vector<8x128xf32>
    %c0_13 = arith.constant 0 : index
    %c0_14 = arith.constant 0 : index
    %17 = vector.load %arg7[%c0_13, %c0_14] : memref<1x128xf32, #tpu.memory_space<vmem>>, vector<1x128xf32>
    %18 = vector.broadcast %17 : vector<1x128xf32> to vector<8x128xf32>
    %19 = arith.addf %16, %18 : vector<8x128xf32>
    %cst_15 = arith.constant 0.000000e+00 : f32
    %20 = vector.broadcast %cst_15 : f32 to vector<8x128xf32>
    %21 = arith.maximumf %19, %20 : vector<8x128xf32>
    %c0_16 = arith.constant 0 : index
    %c0_17 = arith.constant 0 : index
    %22 = vector.load %arg8[%c0_16, %c0_17] : memref<1x128xf32, #tpu.memory_space<vmem>>, vector<1x128xf32>
    %23 = vector.broadcast %22 : vector<1x128xf32> to vector<8x128xf32>
    %24 = arith.mulf %21, %23 : vector<8x128xf32>
    %c0_18 = arith.constant 0 : index
    %c0_19 = arith.constant 0 : index
    %25 = vector.load %arg9[%c0_18, %c0_19] : memref<1x128xf32, #tpu.memory_space<vmem>>, vector<1x128xf32>
    %26 = vector.broadcast %25 : vector<1x128xf32> to vector<8x128xf32>
    %27 = arith.addf %24, %26 : vector<8x128xf32>
    %28 = arith.truncf %27 : vector<8x128xf32> to vector<8x128xbf16>
    %c0_20 = arith.constant 0 : index
    %c0_21 = arith.constant 0 : index
    %29 = vector.load %arg10[%c0_20, %c0_21] : memref<128x128xbf16, #tpu.memory_space<vmem>>, vector<128x128xbf16>
    %cst_22 = arith.constant dense<0.000000e+00> : vector<8x128xf32>
    %30 = tpu.matmul %28, %29, %cst_22 {dimension_numbers = #tpu.dot_dimension_numbers<[1], [0], [0], [1], [0, 0, 1, 1], [], []>} : vector<8x128xbf16>, vector<128x128xbf16>, vector<8x128xf32> -> vector<8x128xf32>
    %c0_23 = arith.constant 0 : index
    %c0_24 = arith.constant 0 : index
    %31 = vector.load %arg11[%c0_23, %c0_24] : memref<1x128xf32, #tpu.memory_space<vmem>>, vector<1x128xf32>
    %32 = vector.broadcast %31 : vector<1x128xf32> to vector<8x128xf32>
    %33 = arith.addf %30, %32 : vector<8x128xf32>
    %c0_25 = arith.constant 0 : index
    %c0_26 = arith.constant 0 : index
    %34 = vector.load %arg12[%c0_25, %c0_26] : memref<8x128xf32, #tpu.memory_space<vmem>>, vector<8x128xf32>
    tpu.vector_store %arg12[%c0_25, %c0_26], %33 {strides = array<i32>} : memref<8x128xf32, #tpu.memory_space<vmem>>, vector<8x128xf32>,
    return
  }
  func.func @transform_0(%arg0: i32) -> (i32, i32) {
    %c0_i32 = arith.constant 0 : i32
    %c0_i32_0 = arith.constant 0 : i32
    %c0_i32_1 = arith.constant 0 : i32
    return %c0_i32, %c0_i32_0 : i32, i32
  }
  func.func @transform_1(%arg0: i32) -> (i32, i32) {
    %c0_i32 = arith.constant 0 : i32
    %c0_i32_0 = arith.constant 0 : i32
    %c0_i32_1 = arith.constant 0 : i32
    return %c0_i32, %c0_i32_0 : i32, i32
  }
  func.func @transform_2(%arg0: i32) -> (i32, i32) {
    %c0_i32 = arith.constant 0 : i32
    %c0_i32_0 = arith.constant 0 : i32
    %c0_i32_1 = arith.constant 0 : i32
    return %c0_i32, %c0_i32_0 : i32, i32
  }
  func.func @transform_3(%arg0: i32) -> (i32, i32) {
    %c0_i32 = arith.constant 0 : i32
    %c0_i32_0 = arith.constant 0 : i32
    %c0_i32_1 = arith.constant 0 : i32
    return %c0_i32, %c0_i32_0 : i32, i32
  }
  func.func @transform_4(%arg0: i32) -> (i32, i32) {
    %c0_i32 = arith.constant 0 : i32
    %c0_i32_0 = arith.constant 0 : i32
    %c0_i32_1 = arith.constant 0 : i32
    return %c0_i32, %c0_i32_0 : i32, i32
  }
  func.func @transform_5(%arg0: i32) -> (i32, i32) {
    %c0_i32 = arith.constant 0 : i32
    %c0_i32_0 = arith.constant 0 : i32
    %c0_i32_1 = arith.constant 0 : i32
    return %c0_i32, %c0_i32_0 : i32, i32
  }
  func.func @transform_6(%arg0: i32) -> (i32, i32) {
    %c0_i32 = arith.constant 0 : i32
    %c0_i32_0 = arith.constant 0 : i32
    %c0_i32_1 = arith.constant 0 : i32
    return %c0_i32, %c0_i32_0 : i32, i32
  }
  func.func @transform_7(%arg0: i32) -> (i32, i32) {
    %c0_i32 = arith.constant 0 : i32
    %c0_i32_0 = arith.constant 0 : i32
    %c0_i32_1 = arith.constant 0 : i32
    return %c0_i32, %c0_i32_0 : i32, i32
  }
  func.func @transform_8(%arg0: i32) -> (i32, i32) {
    %c0_i32 = arith.constant 0 : i32
    %c0_i32_0 = arith.constant 0 : i32
    %c0_i32_1 = arith.constant 0 : i32
    return %c0_i32, %c0_i32_0 : i32, i32
  }
  func.func @transform_9(%arg0: i32) -> (i32, i32) {
    %c0_i32 = arith.constant 0 : i32
    %c0_i32_0 = arith.constant 0 : i32
    %c0_i32_1 = arith.constant 0 : i32
    return %c0_i32, %c0_i32_0 : i32, i32
  }
  func.func @transform_10(%arg0: i32) -> (i32, i32) {
    %c0_i32 = arith.constant 0 : i32
    %c0_i32_0 = arith.constant 0 : i32
    %c0_i32_1 = arith.constant 0 : i32
    return %c0_i32, %c0_i32_0 : i32, i32
  }
  func.func @transform_11(%arg0: i32) -> (i32, i32) {
    %c0_i32 = arith.constant 0 : i32
    %c0_i32_0 = arith.constant 0 : i32
    %c0_i32_1 = arith.constant 0 : i32
    return %c0_i32, %c0_i32_0 : i32, i32
  }
}

</mosaic_0001>

<llo_original>
// kernel: cnn_add_forward.4
$region0: #{cnn_add_forward.4}
  #allocation0 [shape = 'u32[]', space=smem, size = 0x4, offset = 0x4, fixed_abs, tag = 'smem constant byte address 0x4 - core index']
  #allocation1 [shape = 'u32[144,128]{1,0:T(1,128)}', space=vmem, size = 0x12000, scoped, tag = 'internal scratch']
  #allocation2 [shape = 'bf16[32,135]{1,0:T(16,128)(2,1)}', space=vmem, size = 0x4000, scoped, tag = 'scratch operand']
  %s0 = inlined_call_operand.vmem [shape: bf16[8,256], index: 0, kind: input, shape index: {}, may-alias: {0,1}]
  %s1 = inlined_call_operand.vmem [shape: bf16[8,256], index: 1, kind: input, shape index: {}, may-alias: {0,1}]
  %s2 = inlined_call_operand.vmem [shape: bf16[8,32], index: 2, kind: input, shape index: {}]
  %s3 = inlined_call_operand.vmem [shape: f32[8,1], index: 3, kind: input, shape index: {}]
  %s4 = inlined_call_operand.vmem [shape: bf16[8,128], index: 4, kind: output, shape index: {}]
  %s5 = sld [smem:[#allocation0]]
  $region26: #{cnn_add_forward.4} parent=0
    _
  %s7 = ssub.s32 1, %s5
  %s8 = scalar_select 0, %s7, %s5
  // Predicated region
  $region2: #{cnn_add_forward.4} parent=0 // pred_check
    _
  $region3: #{cnn_add_forward.4} parent=0 // pred_check_branch
    %10 = sbr.rel (0) target = $region5
  $region4: #{cnn_add_forward.4} parent=0 // pred_region
    _
  $region5: #{cnn_add_forward.4} parent=0 // pred_fallthru
    _
  // Predicated region
  $region6: #{cnn_add_forward.4} parent=0 // pred_check
    _
  $region7: #{cnn_add_forward.4} parent=0 // pred_check_branch
    %12 = sbr.rel (0) target = $region9
  $region8: #{cnn_add_forward.4} parent=0 // pred_region
    %s13 = sadd.s32 0, 1
    %p14 = scmp.lt.s32.totalorder %s13, 1
    %s15 = scalar_select %p14, %s13, 1
    %s16 = smul.addr %s15, 4
    %s17 = scalar_lea.vmem %s1, %s16
    %s18 = sadd.s32 0, 1
  $region9: #{cnn_add_forward.4} parent=0 // pred_fallthru
    _
  // Predicated region
  $region10: #{cnn_add_forward.4} parent=0 // pred_check
    _
  $region11: #{cnn_add_forward.4} parent=0 // pred_check_branch
    %20 = sbr.rel (0) target = $region13
  $region12: #{cnn_add_forward.4} parent=0 // pred_region
    _
  $region13: #{cnn_add_forward.4} parent=0 // pred_fallthru
    _
  // Predicated region
  $region14: #{cnn_add_forward.4} parent=0 // pred_check
    _
  $region15: #{cnn_add_forward.4} parent=0 // pred_check_branch
    %22 = sbr.rel (0) target = $region17
  $region16: #{cnn_add_forward.4} parent=0 // pred_region
    _
  $region17: #{cnn_add_forward.4} parent=0 // pred_fallthru
    _
  %s23 = sadd.s32 0, 1
  %p24 = scmp.lt.s32.totalorder %s23, 1
  %s25 = scalar_select %p24, %s23, 1
  %s26 = smul.addr %s25, 4
  %s27 = scalar_lea.vmem %s1, %s26
  %s28 = sadd.s32 0, 1
  %p29 = scmp.lt.s32.totalorder %s28, 1
  %s30 = scalar_select %p29, %s28, 1
  %s31 = smul.addr %s30, 4
  %s32 = scalar_lea.vmem %s1, %s31
  %s33 = sadd.s32 0, 1
  %v35 = vld [vmem:[%s0] sm:$0xf]
  %v36 = vld [vmem:[%s32] sm:$0xf]
  %v39 = vrot.slane %v35, 4
  %v40 = vrot.slane %v36, 4
  %41 = vrot.lane.b32.xlu0 %v39, 127
  %v42 = vpop.permute.xlu0 %41
  %43 = vrot.lane.b32.xlu0 %v40, 127
  %v44 = vpop.permute.xlu0 %43
  %vm45 = vcmask 1039360
  %v46 = vsel %vm45, %v42, %v44
  %vm47 = vcmask 1043456
  %v50 = vsel %vm47, %v35, %v46
  %v54 = vsel %vm47, %v36, %v44
  %56 = vst [vmem:[#allocation2] sm:$0xff] %v50
  %vm57 = vcmask 56320
  %58 = vst.msk [vmem:[#allocation2 + $0x8] sm:$0xff] %vm57, %v54
  %61 = vrot.lane.b32.xlu0 %v50, 122
  %v62 = vpop.permute.xlu0 %61
  %63 = vrot.lane.b32.xlu0 %v54, 122
  %v64 = vpop.permute.xlu0 %63
  %vm65 = vcmask 998400
  %v66 = vsel %vm65, %v62, %v64
  %69 = vst [vmem:[#allocation2 + $0x10] sm:$0xff] %v66
  %70 = vst.msk [vmem:[#allocation2 + $0x18] sm:$0xff] %vm57, %v64
  %v71 = vld [vmem:[%s2] sm:$0xf]
  %v72 = vld [vmem:[#allocation2] sm:$0xff]
  %v73 = vld [vmem:[#allocation2 + $0x8] sm:$0xff]
  %v74 = vld [vmem:[#allocation2 + $0x10] sm:$0xff]
  %v75 = vld [vmem:[#allocation2 + $0x18] sm:$0xff]
  %v76 = vld [vmem:[%s3] sm:$0xff]
  %78 = vset.pattern.permute.xlu0 0
  %79 = vperm.xlu0 %78, %v76
  %v80 = vpop.permute.xlu0 %79
  %vm82 = vcmask 261120
  %v84 = vsel %vm82, %v71, 0
  %86 = vmatprep.subr.bf16.mxu0 %v73
  %87 = vmatpush1.bf16.msra.mxu0 %v72
  %88 = vmatprep.subr.bf16.mxu0 %v75
  %89 = vmatpush1.bf16.msra.mxu0 %v74
  %90 = vmatprep.subr.bf16.mxu0 0
  %91 = vmatpush1.bf16.msra.mxu0 0
  %92 = vmatprep.subr.bf16.mxu0 0
  %93 = vmatpush1.bf16.msra.mxu0 0
  %94 = vmatprep.subr.bf16.mxu0 0
  %95 = vmatpush1.bf16.msra.mxu0 0
  %96 = vmatprep.subr.bf16.mxu0 0
  %97 = vmatpush1.bf16.msra.mxu0 0
  %98 = vmatprep.subr.bf16.mxu0 0
  %99 = vmatpush1.bf16.msra.mxu0 0
  %100 = vmatprep.subr.bf16.mxu0 0
  %101 = vmatpush1.bf16.msra.mxu0 0
  %102 = vmatprep.subr.bf16.mxu0 0
  %103 = vmatpush1.bf16.msra.mxu0 0
  %104 = vmatprep.subr.bf16.mxu0 0
  %105 = vmatpush1.bf16.msra.mxu0 0
  %106 = vmatprep.subr.bf16.mxu0 0
  %107 = vmatpush1.bf16.msra.mxu0 0
  %108 = vmatprep.subr.bf16.mxu0 0
  %109 = vmatpush1.bf16.msra.mxu0 0
  %110 = vmatprep.subr.bf16.mxu0 0
  %111 = vmatpush1.bf16.msra.mxu0 0
  %112 = vmatprep.subr.bf16.mxu0 0
  %113 = vmatpush1.bf16.msra.mxu0 0
  %114 = vmatprep.subr.bf16.mxu0 0
  %115 = vmatpush1.bf16.msra.mxu0 0
  %116 = vmatprep.subr.bf16.mxu0 0
  %117 = vmatpush1.bf16.msra.mxu0 0
  %118 = vmatprep.mubr.bf16.mxu0 0
  %119 = vmatmul.mubr.bf16.gmra.mrb[0].mxu0 %v84
  %v120 = vpop.f32.mrb[0].mxu0
  %v121 = vadd.f32 %v80, %v120
  %v122 = vpop.f32.mrb[0].mxu0
  %v123 = vadd.f32 %v80, %v122
  %v124 = vpop.f32.mrb[0].mxu0
  %v125 = vpop.f32.mrb[0].mxu0
  %126 = vdwg.mxu0
  %v127 = vmax.f32 %v121, 0.0
  %v128 = vmax.f32 %v123, 0.0
  %131 = vrot.lane.b32.xlu0 %v127, 127
  %v132 = vpop.permute.xlu0 %131
  %133 = vrot.lane.b32.xlu0 %v128, 127
  %v134 = vpop.permute.xlu0 %133
  %vm135 = vcmask 1039360
  %v136 = vsel %vm135, %v132, %v134
  %v139 = vmax.f32 %v127, %v136
  %v140 = vmax.f32 %v128, %v134
  %143 = vrot.lane.b32.xlu0 %v139, 122
  %v144 = vpop.permute.xlu0 %143
  %145 = vrot.lane.b32.xlu0 %v140, 122
  %v146 = vpop.permute.xlu0 %145
  %vm147 = vcmask 998400
  %v148 = vsel %vm147, %v144, %v146
  %v150 = vmax.f32 %v139, %v148
  %v151 = vpack.c.bf16 %v150, %v150
  %152 = vst [vmem:[%s4] sm:$0xf] %v151
  // Predicated region
  $region18: #{cnn_add_forward.4} parent=0 // pred_check
    _
  $region19: #{cnn_add_forward.4} parent=0 // pred_check_branch
    %154 = sbr.rel (0) target = $region21
  $region20: #{cnn_add_forward.4} parent=0 // pred_region
    _
  $region21: #{cnn_add_forward.4} parent=0 // pred_fallthru
    _
  // Predicated region
  $region22: #{cnn_add_forward.4} parent=0 // pred_check
    _
  $region23: #{cnn_add_forward.4} parent=0 // pred_check_branch
    %156 = sbr.rel (0) target = $region25
  $region24: #{cnn_add_forward.4} parent=0 // pred_region
    _
  $region25: #{cnn_add_forward.4} parent=0 // pred_fallthru
    _

// kernel: cnn_add_forward.3
$region0: #{cnn_add_forward.3}
  #allocation0 [shape = 'u32[]', space=smem, size = 0x4, offset = 0x4, fixed_abs, tag = 'smem constant byte address 0x4 - core index']
  #allocation1 [shape = 'u32[144,128]{1,0:T(1,128)}', space=vmem, size = 0x12000, scoped, tag = 'internal scratch']
  #allocation2 [shape = 'bf16[208,401]{1,0:T(16,128)(2,1)}', space=vmem, size = 0x34000, scoped, tag = 'scratch operand']
  %s0 = inlined_call_operand.vmem [shape: bf16[8,1152], index: 0, kind: input, shape index: {}, may-alias: {0,1}]
  %s1 = inlined_call_operand.vmem [shape: bf16[8,1152], index: 1, kind: input, shape index: {}, may-alias: {0,1}]
  %s2 = inlined_call_operand.vmem [shape: bf16[8,208], index: 2, kind: input, shape index: {}]
  %s3 = inlined_call_operand.vmem [shape: f32[8,1], index: 3, kind: input, shape index: {}]
  %s4 = inlined_call_operand.vmem [shape: bf16[8,768], index: 4, kind: output, shape index: {}]
  %s5 = sld [smem:[#allocation0]]
  $region49: #{cnn_add_forward.3} parent=0
    _
  %s7 = ssub.s32 1, %s5
  %s8 = scalar_select 0, %s7, %s5
  loop: start=0, step=1, limit=4
  $region2: #{cnn_add_forward.3} parent=0 // loop_pre_header
    _
  $region3: #{cnn_add_forward.3} parent=0 // loop_header
    %s10 = sphi 0, %s14
    %p11 = scmp.ge.s32.totalorder %s10, 4
    %s20 = sphi 0, %s22
    %s23 = sphi 0, %s20
    %s24 = sphi 0, %s23
    %s40 = sphi 0, %s24
    %s50 = sphi 0, %s52
    %s53 = sphi 0, %s50
    %s54 = sphi 0, %s53
    %s70 = sphi 0, %s54
    %s74 = sphi 0, %s74
    %s76 = sphi 0, %s74
    %s77 = sphi 0, %s76
    %s91 = sphi 0, %s77
    %s95 = sphi 0, %s95
    %s97 = sphi 0, %s95
    %s98 = sphi 0, %s97
    %s112 = sphi 0, %s98
    %s118 = sphi 0, %s120
    %s121 = sphi 0, %s118
    %s122 = sphi 0, %s121
    %s138 = sphi 0, %s122
  $region4: #{cnn_add_forward.3} parent=0 // loop_header_branch
    %13 = sbr.rel (%p11) target = $region8
  $region5: #{cnn_add_forward.3} parent=0 // loop_body
    %s15 = ssub.s32 %s10, 1
    %s16 = ssub.s32 %s10, 2
    %s17 = sadd.s32 %s10, 1
    %s18 = ssub.s32 %s10, %s17
    %p19 = scmp.eq.s32.totalorder %s18, 0
    %s21 = sadd.s32 %s20, 1
    %s22 = scalar_select %p19, %s20, %s21
    %p25 = pneg %p19
    %p26 = scmp.eq.s32.totalorder %s10, 1
    %p27 = por %p25, %p26
    %p28 = scmp.ne.s32.totalorder %s20, %s23
    %p29 = scmp.eq.s32.totalorder %s10, 0
    %p30 = por %p28, %p29
    %p31 = scmp.ne.s32.totalorder %s20, %s23
    %p32 = scmp.eq.s32.totalorder %s15, 1
    %p33 = por %p31, %p32
    %p34 = scmp.ne.s32.totalorder %s23, %s24
    %p35 = scmp.eq.s32.totalorder %s15, 0
    %p36 = por %p34, %p35
    %p37 = scmp.ne.s32.totalorder %s23, %s24
    %p38 = scmp.eq.s32.totalorder %s16, 1
    %p39 = por %p37, %p38
    %p41 = scmp.ne.s32.totalorder %s24, %s40
    %p42 = scmp.eq.s32.totalorder %s16, 0
    %p43 = por %p41, %p42
    %s44 = sadd.s32 %s10, 1
    %s45 = smul.u32 %s44, 3
    %s46 = sadd.s32 %s17, 1
    %s47 = smul.u32 %s46, 3
    %s48 = ssub.s32 %s45, %s47
    %p49 = scmp.eq.s32.totalorder %s48, 0
    %s51 = sadd.s32 %s50, 1
    %s52 = scalar_select %p49, %s50, %s51
    %p55 = pneg %p49
    %p56 = scmp.eq.s32.totalorder %s10, 1
    %p57 = por %p55, %p56
    %p58 = scmp.ne.s32.totalorder %s50, %s53
    %p59 = scmp.eq.s32.totalorder %s10, 0
    %p60 = por %p58, %p59
    %p61 = scmp.ne.s32.totalorder %s50, %s53
    %p62 = scmp.eq.s32.totalorder %s15, 1
    %p63 = por %p61, %p62
    %p64 = scmp.ne.s32.totalorder %s53, %s54
    %p65 = scmp.eq.s32.totalorder %s15, 0
    %p66 = por %p64, %p65
    %p67 = scmp.ne.s32.totalorder %s53, %s54
    %p68 = scmp.eq.s32.totalorder %s16, 1
    %p69 = por %p67, %p68
    %p71 = scmp.ne.s32.totalorder %s54, %s70
    %p72 = scmp.eq.s32.totalorder %s16, 0
    %p73 = por %p71, %p72
    %s75 = sadd.s32 %s74, 1
    %p78 = scmp.eq.s32.totalorder %s10, 1
    %p79 = scmp.ne.s32.totalorder %s74, %s76
    %p80 = scmp.eq.s32.totalorder %s10, 0
    %p81 = por %p79, %p80
    %p82 = scmp.ne.s32.totalorder %s74, %s76
    %p83 = scmp.eq.s32.totalorder %s15, 1
    %p84 = por %p82, %p83
    %p85 = scmp.ne.s32.totalorder %s76, %s77
    %p86 = scmp.eq.s32.totalorder %s15, 0
    %p87 = por %p85, %p86
    %p88 = scmp.ne.s32.totalorder %s76, %s77
    %p89 = scmp.eq.s32.totalorder %s16, 1
    %p90 = por %p88, %p89
    %p92 = scmp.ne.s32.totalorder %s77, %s91
    %p93 = scmp.eq.s32.totalorder %s16, 0
    %p94 = por %p92, %p93
    %s96 = sadd.s32 %s95, 1
    %p99 = scmp.eq.s32.totalorder %s10, 1
    %p100 = scmp.ne.s32.totalorder %s95, %s97
    %p101 = scmp.eq.s32.totalorder %s10, 0
    %p102 = por %p100, %p101
    %p103 = scmp.ne.s32.totalorder %s95, %s97
    %p104 = scmp.eq.s32.totalorder %s15, 1
    %p105 = por %p103, %p104
    %p106 = scmp.ne.s32.totalorder %s97, %s98
    %p107 = scmp.eq.s32.totalorder %s15, 0
    %p108 = por %p106, %p107
    %p109 = scmp.ne.s32.totalorder %s97, %s98
    %p110 = scmp.eq.s32.totalorder %s16, 1
    %p111 = por %p109, %p110
    %p113 = scmp.ne.s32.totalorder %s98, %s112
    %p114 = scmp.eq.s32.totalorder %s16, 0
    %p115 = por %p113, %p114
    %s116 = ssub.s32 %s10, %s17
    %p117 = scmp.eq.s32.totalorder %s116, 0
    %s119 = sadd.s32 %s118, 1
    %s120 = scalar_select %p117, %s118, %s119
    %p123 = pneg %p117
    %p124 = scmp.eq.s32.totalorder %s10, 1
    %p125 = por %p123, %p124
    %p126 = scmp.ne.s32.totalorder %s118, %s121
    %p127 = scmp.eq.s32.totalorder %s10, 0
    %p128 = por %p126, %p127
    %p129 = scmp.ne.s32.totalorder %s118, %s121
    %p130 = scmp.eq.s32.totalorder %s15, 1
    %p131 = por %p129, %p130
    %p132 = scmp.ne.s32.totalorder %s121, %s122
    %p133 = scmp.eq.s32.totalorder %s15, 0
    %p134 = por %p132, %p133
    %p135 = scmp.ne.s32.totalorder %s121, %s122
    %p136 = scmp.eq.s32.totalorder %s16, 1
    %p137 = por %p135, %p136
    %p139 = scmp.ne.s32.totalorder %s122, %s138
    %p140 = scmp.eq.s32.totalorder %s16, 0
    %p141 = por %p139, %p140
    %p142 = scmp.le.s32.totalorder 1, %s10
    %p143 = scmp.lt.s32.totalorder %s10, 3
    %p144 = pnand %p142, %p143
    %p145 = pneg %p144
    // Predicated region
    $region9: #{cnn_add_forward.3} parent=5 // pred_check
      _
    $region10: #{cnn_add_forward.3} parent=5 // pred_check_branch
      %147 = sbr.rel (%p144) target = $region12
    $region11: #{cnn_add_forward.3} parent=5 // pred_region
      %s148 = ssub.s32 %s10, 1
      // Predicated region
      $region13: #{cnn_add_forward.3} parent=11 // pred_check
        %p149 = pneg %p87
      $region14: #{cnn_add_forward.3} parent=11 // pred_check_branch
        %151 = sbr.rel (%p149) target = $region16
      $region15: #{cnn_add_forward.3} parent=11 // pred_region
        _
      $region16: #{cnn_add_forward.3} parent=11 // pred_fallthru
        _
      // Predicated region
      $region17: #{cnn_add_forward.3} parent=11 // pred_check
        %p152 = pneg %p108
      $region18: #{cnn_add_forward.3} parent=11 // pred_check_branch
        %154 = sbr.rel (%p152) target = $region20
      $region19: #{cnn_add_forward.3} parent=11 // pred_region
        _
      $region20: #{cnn_add_forward.3} parent=11 // pred_fallthru
        _
    $region12: #{cnn_add_forward.3} parent=5 // pred_fallthru
      _
    %p155 = scmp.lt.s32.totalorder %s10, 2
    // Predicated region
    $region21: #{cnn_add_forward.3} parent=5 // pred_check
      %p156 = pneg %p155
    $region22: #{cnn_add_forward.3} parent=5 // pred_check_branch
      %158 = sbr.rel (%p156) target = $region24
    $region23: #{cnn_add_forward.3} parent=5 // pred_region
      // Predicated region
      $region25: #{cnn_add_forward.3} parent=23 // pred_check
        %p159 = pneg %p30
      $region26: #{cnn_add_forward.3} parent=23 // pred_check_branch
        %161 = sbr.rel (%p159) target = $region28
      $region27: #{cnn_add_forward.3} parent=23 // pred_region
        %s162 = smul.u32 3, %s10
        %p163 = scmp.lt.s32.totalorder %s162, 8
        %s164 = scalar_select %p163, %s162, 8
        %s165 = smul.addr %s164, 4
        %s166 = scalar_lea.vmem %s0, %s165
        %s167 = smul.u32 3, %s10
      $region28: #{cnn_add_forward.3} parent=23 // pred_fallthru
        _
      // Predicated region
      $region29: #{cnn_add_forward.3} parent=23 // pred_check
        %p168 = pneg %p60
      $region30: #{cnn_add_forward.3} parent=23 // pred_check_branch
        %170 = sbr.rel (%p168) target = $region32
      $region31: #{cnn_add_forward.3} parent=23 // pred_region
        %s171 = sadd.s32 %s10, 1
        %s172 = smul.u32 %s171, 3
        %p173 = scmp.lt.s32.totalorder %s172, 8
        %s174 = scalar_select %p173, %s172, 8
        %s175 = smul.addr %s174, 4
        %s176 = scalar_lea.vmem %s1, %s175
        %s177 = sadd.s32 %s10, 1
        %s178 = smul.u32 %s177, 3
      $region32: #{cnn_add_forward.3} parent=23 // pred_fallthru
        _
    $region24: #{cnn_add_forward.3} parent=5 // pred_fallthru
      _
    %p179 = scmp.le.s32.totalorder 1, %s10
    %p180 = scmp.lt.s32.totalorder %s10, 3
    %p181 = pnand %p179, %p180
    %p182 = pneg %p181
    // Predicated region
    $region33: #{cnn_add_forward.3} parent=5 // pred_check
      _
    $region34: #{cnn_add_forward.3} parent=5 // pred_check_branch
      %184 = sbr.rel (%p181) target = $region36
    $region35: #{cnn_add_forward.3} parent=5 // pred_region
      %s185 = ssub.s32 %s10, 1
      %s186 = smul.u32 3, %s15
      %p187 = scmp.lt.s32.totalorder %s186, 8
      %s188 = scalar_select %p187, %s186, 8
      %s189 = smul.addr %s188, 4
      %s190 = scalar_lea.vmem %s0, %s189
      %p191 = pneg %p36
      %p192 = pneg %p33
      %s193 = sadd.s32 %s15, 1
      %s194 = smul.u32 %s193, 3
      %p195 = scmp.lt.s32.totalorder %s194, 8
      %s196 = scalar_select %p195, %s194, 8
      %s197 = smul.addr %s196, 4
      %s198 = scalar_lea.vmem %s1, %s197
      %p199 = pneg %p66
      %p200 = pneg %p63
      %p201 = pneg %p87
      %p202 = pneg %p84
      %p203 = pneg %p108
      %p204 = pneg %p105
      %p205 = pneg %p134
      %p206 = pneg %p131
      %s207 = smul.u32 3, %s15
      %p208 = scmp.lt.s32.totalorder %s207, 5
      %s209 = scalar_select %p208, %s207, 5
      %s210 = smul.addr %s209, 4
      %s211 = scalar_lea.vmem %s4, %s210
      %s212 = smul.u32 3, %s15
      %p213 = scmp.lt.s32.totalorder %s212, 8
      %s214 = scalar_select %p213, %s212, 8
      %s215 = smul.addr %s214, 4
      %s216 = scalar_lea.vmem %s0, %s215
      %s217 = smul.u32 3, %s15
      %s218 = sadd.s32 %s15, 1
      %s219 = smul.u32 %s218, 3
      %p220 = scmp.lt.s32.totalorder %s219, 8
      %s221 = scalar_select %p220, %s219, 8
      %s222 = smul.addr %s221, 4
      %s223 = scalar_lea.vmem %s1, %s222
      %s224 = sadd.s32 %s15, 1
      %s225 = smul.u32 %s224, 3
      %s226 = smul.u32 3, %s15
      %p227 = scmp.lt.s32.totalorder %s226, 5
      %s228 = scalar_select %p227, %s226, 5
      %s229 = smul.addr %s228, 4
      %s230 = scalar_lea.vmem %s4, %s229
      %s231 = smul.u32 3, %s15
      %v233 = vld [vmem:[%s216] sm:$0xff]
      %v234 = vld [vmem:[%s216 + $0x8] sm:$0xf]
      %v235 = vld [vmem:[%s223] sm:$0xf]
      %v238 = vunpack.c.l.b16 %v233
      %v239 = vunpack.c.h.b16 %v233
      %v240 = vunpack.c.l.b16 %v234
      %v241 = vpack.c.b16 %v238, %v238
      %v242 = vpack.c.b16 %v239, %v239
      %v243 = vpack.c.b16 %v240, %v240
      %v245 = vrot.slane %v241, 4
      %v246 = vrot.slane %v242, 4
      %v247 = vrot.slane %v243, 4
      %v248 = vrot.slane %v235, 4
      %249 = vrot.lane.b32.xlu0 %v245, 127
      %v250 = vpop.permute.xlu0 %249
      %251 = vrot.lane.b32.xlu0 %v246, 127
      %v252 = vpop.permute.xlu0 %251
      %253 = vrot.lane.b32.xlu0 %v247, 127
      %v254 = vpop.permute.xlu0 %253
      %255 = vrot.lane.b32.xlu0 %v248, 127
      %v256 = vpop.permute.xlu0 %255
      %vm257 = vcmask 1039360
      %v258 = vsel %vm257, %v250, %v252
      %v259 = vsel %vm257, %v252, %v254
      %v260 = vsel %vm257, %v254, %v256
      %vm261 = vcmask 1043456
      %v264 = vsel %vm261, %v241, %v258
      %v268 = vsel %vm261, %v242, %v259
      %v272 = vsel %vm261, %v243, %v260
      %v276 = vsel %vm261, %v235, %v256
      %278 = vst [vmem:[#allocation2] sm:$0xff] %v264
      %279 = vst [vmem:[#allocation2 + $0x8] sm:$0xff] %v268
      %280 = vst [vmem:[#allocation2 + $0x10] sm:$0xff] %v272
      %vm281 = vcmask 138240
      %282 = vst.msk [vmem:[#allocation2 + $0x18] sm:$0xff] %vm281, %v276
      %287 = vrot.lane.b32.xlu0 %v264, 126
      %v288 = vpop.permute.xlu0 %287
      %289 = vrot.lane.b32.xlu0 %v268, 126
      %v290 = vpop.permute.xlu0 %289
      %291 = vrot.lane.b32.xlu0 %v272, 126
      %v292 = vpop.permute.xlu0 %291
      %293 = vrot.lane.b32.xlu0 %v276, 126
      %v294 = vpop.permute.xlu0 %293
      %vm295 = vcmask 1031168
      %v296 = vsel %vm295, %v288, %v290
      %v297 = vsel %vm295, %v290, %v292
      %v298 = vsel %vm295, %v292, %v294
      %303 = vst [vmem:[#allocation2 + $0x20] sm:$0xff] %v296
      %304 = vst [vmem:[#allocation2 + $0x28] sm:$0xff] %v297
      %305 = vst [vmem:[#allocation2 + $0x30] sm:$0xff] %v298
      %306 = vst.msk [vmem:[#allocation2 + $0x38] sm:$0xff] %vm281, %v294
      %307 = vrot.lane.b32.xlu0 %v245, 116
      %v308 = vpop.permute.xlu0 %307
      %309 = vrot.lane.b32.xlu0 %v246, 116
      %v310 = vpop.permute.xlu0 %309
      %311 = vrot.lane.b32.xlu0 %v247, 116
      %v312 = vpop.permute.xlu0 %311
      %313 = vrot.lane.b32.xlu0 %v248, 116
      %v314 = vpop.permute.xlu0 %313
      %vm315 = vcmask 949248
      %v316 = vsel %vm315, %v308, %v310
      %v317 = vsel %vm315, %v310, %v312
      %v318 = vsel %vm315, %v312, %v314
      %v320 = vsel %vm261, %v241, %v316
      %v322 = vsel %vm261, %v242, %v317
      %v324 = vsel %vm261, %v243, %v318
      %v326 = vsel %vm261, %v235, %v314
      %331 = vrot.lane.b32.xlu0 %v320, 124
      %v332 = vpop.permute.xlu0 %331
      %333 = vrot.lane.b32.xlu0 %v322, 124
      %v334 = vpop.permute.xlu0 %333
      %335 = vrot.lane.b32.xlu0 %v324, 124
      %v336 = vpop.permute.xlu0 %335
      %337 = vrot.lane.b32.xlu0 %v326, 124
      %v338 = vpop.permute.xlu0 %337
      %vm339 = vcmask 1014784
      %v340 = vsel %vm339, %v332, %v334
      %v341 = vsel %vm339, %v334, %v336
      %v342 = vsel %vm339, %v336, %v338
      %347 = vst [vmem:[#allocation2 + $0x40] sm:$0xff] %v340
      %348 = vst [vmem:[#allocation2 + $0x48] sm:$0xff] %v341
      %349 = vst [vmem:[#allocation2 + $0x50] sm:$0xff] %v342
      %350 = vst.msk [vmem:[#allocation2 + $0x58] sm:$0xff] %vm281, %v338
      %351 = vrot.lane.b32.xlu0 %v264, 111
      %v352 = vpop.permute.xlu0 %351
      %353 = vrot.lane.b32.xlu0 %v268, 111
      %v354 = vpop.permute.xlu0 %353
      %355 = vrot.lane.b32.xlu0 %v272, 111
      %v356 = vpop.permute.xlu0 %355
      %357 = vrot.lane.b32.xlu0 %v276, 111
      %v358 = vpop.permute.xlu0 %357
      %vm359 = vcmask 908288
      %v360 = vsel %vm359, %v352, %v354
      %v361 = vsel %vm359, %v354, %v356
      %v362 = vsel %vm359, %v356, %v358
      %367 = vst [vmem:[#allocation2 + $0x60] sm:$0xff] %v360
      %368 = vst [vmem:[#allocation2 + $0x68] sm:$0xff] %v361
      %369 = vst [vmem:[#allocation2 + $0x70] sm:$0xff] %v362
      %370 = vst.msk [vmem:[#allocation2 + $0x78] sm:$0xff] %vm281, %v358
      %371 = vrot.lane.b32.xlu0 %v264, 109
      %v372 = vpop.permute.xlu0 %371
      %373 = vrot.lane.b32.xlu0 %v268, 109
      %v374 = vpop.permute.xlu0 %373
      %375 = vrot.lane.b32.xlu0 %v272, 109
      %v376 = vpop.permute.xlu0 %375
      %377 = vrot.lane.b32.xlu0 %v276, 109
      %v378 = vpop.permute.xlu0 %377
      %vm379 = vcmask 891904
      %v380 = vsel %vm379, %v372, %v374
      %v381 = vsel %vm379, %v374, %v376
      %v382 = vsel %vm379, %v376, %v378
      %387 = vst [vmem:[#allocation2 + $0x80] sm:$0xff] %v380
      %388 = vst [vmem:[#allocation2 + $0x88] sm:$0xff] %v381
      %389 = vst [vmem:[#allocation2 + $0x90] sm:$0xff] %v382
      %390 = vst.msk [vmem:[#allocation2 + $0x98] sm:$0xff] %vm281, %v378
      %391 = vrot.lane.b32.xlu0 %v264, 96
      %v392 = vpop.permute.xlu0 %391
      %393 = vrot.lane.b32.xlu0 %v268, 96
      %v394 = vpop.permute.xlu0 %393
      %395 = vrot.lane.b32.xlu0 %v272, 96
      %v396 = vpop.permute.xlu0 %395
      %397 = vrot.lane.b32.xlu0 %v276, 96
      %v398 = vpop.permute.xlu0 %397
      %vm399 = vcmask 785408
      %v400 = vsel %vm399, %v392, %v394
      %v401 = vsel %vm399, %v394, %v396
      %v402 = vsel %vm399, %v396, %v398
      %407 = vst [vmem:[#allocation2 + $0xa0] sm:$0xff] %v400
      %408 = vst [vmem:[#allocation2 + $0xa8] sm:$0xff] %v401
      %409 = vst [vmem:[#allocation2 + $0xb0] sm:$0xff] %v402
      %410 = vst.msk [vmem:[#allocation2 + $0xb8] sm:$0xff] %vm281, %v398
      %411 = vrot.lane.b32.xlu0 %v264, 94
      %v412 = vpop.permute.xlu0 %411
      %413 = vrot.lane.b32.xlu0 %v268, 94
      %v414 = vpop.permute.xlu0 %413
      %415 = vrot.lane.b32.xlu0 %v272, 94
      %v416 = vpop.permute.xlu0 %415
      %417 = vrot.lane.b32.xlu0 %v276, 94
      %v418 = vpop.permute.xlu0 %417
      %vm419 = vcmask 769024
      %v420 = vsel %vm419, %v412, %v414
      %v421 = vsel %vm419, %v414, %v416
      %v422 = vsel %vm419, %v416, %v418
      %427 = vst [vmem:[#allocation2 + $0xc0] sm:$0xff] %v420
      %428 = vst [vmem:[#allocation2 + $0xc8] sm:$0xff] %v421
      %429 = vst [vmem:[#allocation2 + $0xd0] sm:$0xff] %v422
      %430 = vst.msk [vmem:[#allocation2 + $0xd8] sm:$0xff] %vm281, %v418
      %431 = vrot.lane.b32.xlu0 %v320, 92
      %v432 = vpop.permute.xlu0 %431
      %433 = vrot.lane.b32.xlu0 %v322, 92
      %v434 = vpop.permute.xlu0 %433
      %435 = vrot.lane.b32.xlu0 %v324, 92
      %v436 = vpop.permute.xlu0 %435
      %437 = vrot.lane.b32.xlu0 %v326, 92
      %v438 = vpop.permute.xlu0 %437
      %vm439 = vcmask 752640
      %v440 = vsel %vm439, %v432, %v434
      %v441 = vsel %vm439, %v434, %v436
      %v442 = vsel %vm439, %v436, %v438
      %447 = vst [vmem:[#allocation2 + $0xe0] sm:$0xff] %v440
      %448 = vst [vmem:[#allocation2 + $0xe8] sm:$0xff] %v441
      %449 = vst [vmem:[#allocation2 + $0xf0] sm:$0xff] %v442
      %450 = vst.msk [vmem:[#allocation2 + $0xf8] sm:$0xff] %vm281, %v438
      %451 = vrot.lane.b32.xlu0 %v264, 79
      %v452 = vpop.permute.xlu0 %451
      %453 = vrot.lane.b32.xlu0 %v268, 79
      %v454 = vpop.permute.xlu0 %453
      %455 = vrot.lane.b32.xlu0 %v272, 79
      %v456 = vpop.permute.xlu0 %455
      %457 = vrot.lane.b32.xlu0 %v276, 79
      %v458 = vpop.permute.xlu0 %457
      %vm459 = vcmask 646144
      %v460 = vsel %vm459, %v452, %v454
      %v461 = vsel %vm459, %v454, %v456
      %v462 = vsel %vm459, %v456, %v458
      %467 = vst [vmem:[#allocation2 + $0x100] sm:$0xff] %v460
      %468 = vst [vmem:[#allocation2 + $0x108] sm:$0xff] %v461
      %469 = vst [vmem:[#allocation2 + $0x110] sm:$0xff] %v462
      %470 = vst.msk [vmem:[#allocation2 + $0x118] sm:$0xff] %vm281, %v458
      %471 = vrot.lane.b32.xlu0 %v264, 77
      %v472 = vpop.permute.xlu0 %471
      %473 = vrot.lane.b32.xlu0 %v268, 77
      %v474 = vpop.permute.xlu0 %473
      %475 = vrot.lane.b32.xlu0 %v272, 77
      %v476 = vpop.permute.xlu0 %475
      %477 = vrot.lane.b32.xlu0 %v276, 77
      %v478 = vpop.permute.xlu0 %477
      %vm479 = vcmask 629760
      %v480 = vsel %vm479, %v472, %v474
      %v481 = vsel %vm479, %v474, %v476
      %v482 = vsel %vm479, %v476, %v478
      %487 = vst [vmem:[#allocation2 + $0x120] sm:$0xff] %v480
      %488 = vst [vmem:[#allocation2 + $0x128] sm:$0xff] %v481
      %489 = vst [vmem:[#allocation2 + $0x130] sm:$0xff] %v482
      %490 = vst.msk [vmem:[#allocation2 + $0x138] sm:$0xff] %vm281, %v478
      %491 = vrot.lane.b32.xlu0 %v264, 64
      %v492 = vpop.permute.xlu0 %491
      %493 = vrot.lane.b32.xlu0 %v268, 64
      %v494 = vpop.permute.xlu0 %493
      %495 = vrot.lane.b32.xlu0 %v272, 64
      %v496 = vpop.permute.xlu0 %495
      %497 = vrot.lane.b32.xlu0 %v276, 64
      %v498 = vpop.permute.xlu0 %497
      %vm499 = vcmask 523264
      %v500 = vsel %vm499, %v492, %v494
      %v501 = vsel %vm499, %v494, %v496
      %v502 = vsel %vm499, %v496, %v498
      %507 = vst [vmem:[#allocation2 + $0x140] sm:$0xff] %v500
      %508 = vst [vmem:[#allocation2 + $0x148] sm:$0xff] %v501
      %509 = vst [vmem:[#allocation2 + $0x150] sm:$0xff] %v502
      %510 = vst.msk [vmem:[#allocation2 + $0x158] sm:$0xff] %vm281, %v498
      %511 = vrot.lane.b32.xlu0 %v264, 62
      %v512 = vpop.permute.xlu0 %511
      %513 = vrot.lane.b32.xlu0 %v268, 62
      %v514 = vpop.permute.xlu0 %513
      %515 = vrot.lane.b32.xlu0 %v272, 62
      %v516 = vpop.permute.xlu0 %515
      %517 = vrot.lane.b32.xlu0 %v276, 62
      %v518 = vpop.permute.xlu0 %517
      %vm519 = vcmask 506880
      %v520 = vsel %vm519, %v512, %v514
      %v521 = vsel %vm519, %v514, %v516
      %v522 = vsel %vm519, %v516, %v518
      %527 = vst [vmem:[#allocation2 + $0x160] sm:$0xff] %v520
      %528 = vst [vmem:[#allocation2 + $0x168] sm:$0xff] %v521
      %529 = vst [vmem:[#allocation2 + $0x170] sm:$0xff] %v522
      %530 = vst.msk [vmem:[#allocation2 + $0x178] sm:$0xff] %vm281, %v518
      %v532 = vsel %vm261, %v241, 0
      %v533 = vsel %vm261, %v242, 0
      %v534 = vsel %vm261, %v243, 0
      %v535 = vsel %vm261, %v235, 0
      %540 = vrot.lane.b32.xlu0 %v532, 60
      %v541 = vpop.permute.xlu0 %540
      %542 = vrot.lane.b32.xlu0 %v533, 60
      %v543 = vpop.permute.xlu0 %542
      %544 = vrot.lane.b32.xlu0 %v534, 60
      %v545 = vpop.permute.xlu0 %544
      %546 = vrot.lane.b32.xlu0 %v535, 60
      %v547 = vpop.permute.xlu0 %546
      %vm548 = vcmask 490496
      %v549 = vsel %vm548, %v541, %v543
      %v550 = vsel %vm548, %v543, %v545
      %v551 = vsel %vm548, %v545, %v547
      %556 = vst [vmem:[#allocation2 + $0x180] sm:$0xff] %v549
      %557 = vst [vmem:[#allocation2 + $0x188] sm:$0xff] %v550
      %558 = vst [vmem:[#allocation2 + $0x190] sm:$0xff] %v551
      %559 = vst.msk [vmem:[#allocation2 + $0x198] sm:$0xff] %vm281, %v547
      %v560 = vld [vmem:[%s2] sm:$0xff]
      %v561 = vld [vmem:[#allocation2] sm:$0xff]
      %v562 = vld [vmem:[#allocation2 + $0x8] sm:$0xff]
      %v563 = vld [vmem:[#allocation2 + $0x10] sm:$0xff]
      %v564 = vld [vmem:[#allocation2 + $0x18] sm:$0xff]
      %v565 = vld [vmem:[#allocation2 + $0x20] sm:$0xff]
      %v566 = vld [vmem:[#allocation2 + $0x28] sm:$0xff]
      %v567 = vld [vmem:[#allocation2 + $0x30] sm:$0xff]
      %v568 = vld [vmem:[#allocation2 + $0x38] sm:$0xff]
      %v569 = vld [vmem:[#allocation2 + $0x40] sm:$0xff]
      %v570 = vld [vmem:[#allocation2 + $0x48] sm:$0xff]
      %v571 = vld [vmem:[#allocation2 + $0x50] sm:$0xff]
      %v572 = vld [vmem:[#allocation2 + $0x58] sm:$0xff]
      %v573 = vld [vmem:[#allocation2 + $0x60] sm:$0xff]
      %v574 = vld [vmem:[#allocation2 + $0x68] sm:$0xff]
      %v575 = vld [vmem:[#allocation2 + $0x70] sm:$0xff]
      %v576 = vld [vmem:[#allocation2 + $0x78] sm:$0xff]
      %v577 = vld [vmem:[#allocation2 + $0x80] sm:$0xff]
      %v578 = vld [vmem:[#allocation2 + $0x88] sm:$0xff]
      %v579 = vld [vmem:[#allocation2 + $0x90] sm:$0xff]
      %v580 = vld [vmem:[#allocation2 + $0x98] sm:$0xff]
      %v581 = vld [vmem:[#allocation2 + $0xa0] sm:$0xff]
      %v582 = vld [vmem:[#allocation2 + $0xa8] sm:$0xff]
      %v583 = vld [vmem:[#allocation2 + $0xb0] sm:$0xff]
      %v584 = vld [vmem:[#allocation2 + $0xb8] sm:$0xff]
      %v585 = vld [vmem:[#allocation2 + $0xc0] sm:$0xff]
      %v586 = vld [vmem:[#allocation2 + $0xc8] sm:$0xff]
      %v587 = vld [vmem:[#allocation2 + $0xd0] sm:$0xff]
      %v588 = vld [vmem:[#allocation2 + $0xd8] sm:$0xff]
      %v589 = vld [vmem:[#allocation2 + $0xe0] sm:$0xff]
      %v590 = vld [vmem:[#allocation2 + $0xe8] sm:$0xff]
      %v591 = vld [vmem:[#allocation2 + $0xf0] sm:$0xff]
      %v592 = vld [vmem:[#allocation2 + $0xf8] sm:$0xff]
      %v593 = vld [vmem:[#allocation2 + $0x100] sm:$0xff]
      %v594 = vld [vmem:[#allocation2 + $0x108] sm:$0xff]
      %v595 = vld [vmem:[#allocation2 + $0x110] sm:$0xff]
      %v596 = vld [vmem:[#allocation2 + $0x118] sm:$0xff]
      %v597 = vld [vmem:[#allocation2 + $0x120] sm:$0xff]
      %v598 = vld [vmem:[#allocation2 + $0x128] sm:$0xff]
      %v599 = vld [vmem:[#allocation2 + $0x130] sm:$0xff]
      %v600 = vld [vmem:[#allocation2 + $0x138] sm:$0xff]
      %v601 = vld [vmem:[#allocation2 + $0x140] sm:$0xff]
      %v602 = vld [vmem:[#allocation2 + $0x148] sm:$0xff]
      %v603 = vld [vmem:[#allocation2 + $0x150] sm:$0xff]
      %v604 = vld [vmem:[#allocation2 + $0x158] sm:$0xff]
      %v605 = vld [vmem:[#allocation2 + $0x160] sm:$0xff]
      %v606 = vld [vmem:[#allocation2 + $0x168] sm:$0xff]
      %v607 = vld [vmem:[#allocation2 + $0x170] sm:$0xff]
      %v608 = vld [vmem:[#allocation2 + $0x178] sm:$0xff]
      %v609 = vld [vmem:[#allocation2 + $0x180] sm:$0xff]
      %v610 = vld [vmem:[#allocation2 + $0x188] sm:$0xff]
      %v611 = vld [vmem:[#allocation2 + $0x190] sm:$0xff]
      %v612 = vld [vmem:[#allocation2 + $0x198] sm:$0xff]
      %v613 = vld [vmem:[%s3] sm:$0xff]
      %615 = vset.pattern.permute.xlu0 0
      %616 = vperm.xlu0 %615, %v613
      %v617 = vpop.permute.xlu0 %616
      %v620 = vunpack.c.l.b16 %v560
      %v621 = vunpack.c.h.b16 %v560
      %v622 = vpack.c.b16 %v620, %v620
      %v623 = vpack.c.b16 %v621, %v621
      %vm625 = vcmask 654336
      %v627 = vsel %vm625, %v623, 0
      %629 = vmatprep.subr.bf16.mxu0 %v562
      %630 = vmatpush1.bf16.msra.mxu0 %v561
      %631 = vmatprep.subr.bf16.mxu0 %v566
      %632 = vmatpush1.bf16.msra.mxu0 %v565
      %633 = vmatprep.subr.bf16.mxu0 %v570
      %634 = vmatpush1.bf16.msra.mxu0 %v569
      %635 = vmatprep.subr.bf16.mxu0 %v574
      %636 = vmatpush1.bf16.msra.mxu0 %v573
      %637 = vmatprep.subr.bf16.mxu0 %v578
      %638 = vmatpush1.bf16.msra.mxu0 %v577
      %639 = vmatprep.subr.bf16.mxu0 %v582
      %640 = vmatpush1.bf16.msra.mxu0 %v581
      %641 = vmatprep.subr.bf16.mxu0 %v586
      %642 = vmatpush1.bf16.msra.mxu0 %v585
      %643 = vmatprep.subr.bf16.mxu0 %v590
      %644 = vmatpush1.bf16.msra.mxu0 %v589
      %645 = vmatprep.subr.bf16.mxu0 %v594
      %646 = vmatpush1.bf16.msra.mxu0 %v593
      %647 = vmatprep.subr.bf16.mxu0 %v598
      %648 = vmatpush1.bf16.msra.mxu0 %v597
      %649 = vmatprep.subr.bf16.mxu0 %v602
      %650 = vmatpush1.bf16.msra.mxu0 %v601
      %651 = vmatprep.subr.bf16.mxu0 %v606
      %652 = vmatpush1.bf16.msra.mxu0 %v605
      %653 = vmatprep.subr.bf16.mxu0 %v610
      %654 = vmatpush1.bf16.msra.mxu0 %v609
      %655 = vmatprep.subr.bf16.mxu0 0
      %656 = vmatpush1.bf16.msra.mxu0 0
      %657 = vmatprep.subr.bf16.mxu0 0
      %658 = vmatpush1.bf16.msra.mxu0 0
      %659 = vmatprep.subr.bf16.mxu0 0
      %660 = vmatpush1.bf16.msra.mxu0 0
      %661 = vmatprep.mubr.bf16.mxu0 %v627
      %662 = vmatmul.mubr.bf16.gmra.mrb[0].mxu0 %v622
      %v663 = vpop.f32.mrb[0].mxu0
      %v664 = vadd.f32 %v617, %v663
      %v665 = vpop.f32.mrb[0].mxu0
      %v666 = vadd.f32 %v617, %v665
      %v667 = vpop.f32.mrb[0].mxu0
      %v668 = vpop.f32.mrb[0].mxu0
      %669 = vdwg.mxu0
      %670 = vmatprep.subr.bf16.mxu0 %v564
      %671 = vmatpush1.bf16.msra.mxu0 %v563
      %672 = vmatprep.subr.bf16.mxu0 %v568
      %673 = vmatpush1.bf16.msra.mxu0 %v567
      %674 = vmatprep.subr.bf16.mxu0 %v572
      %675 = vmatpush1.bf16.msra.mxu0 %v571
      %676 = vmatprep.subr.bf16.mxu0 %v576
      %677 = vmatpush1.bf16.msra.mxu0 %v575
      %678 = vmatprep.subr.bf16.mxu0 %v580
      %679 = vmatpush1.bf16.msra.mxu0 %v579
      %680 = vmatprep.subr.bf16.mxu0 %v584
      %681 = vmatpush1.bf16.msra.mxu0 %v583
      %682 = vmatprep.subr.bf16.mxu0 %v588
      %683 = vmatpush1.bf16.msra.mxu0 %v587
      %684 = vmatprep.subr.bf16.mxu0 %v592
      %685 = vmatpush1.bf16.msra.mxu0 %v591
      %686 = vmatprep.subr.bf16.mxu0 %v596
      %687 = vmatpush1.bf16.msra.mxu0 %v595
      %688 = vmatprep.subr.bf16.mxu0 %v600
      %689 = vmatpush1.bf16.msra.mxu0 %v599
      %690 = vmatprep.subr.bf16.mxu0 %v604
      %691 = vmatpush1.bf16.msra.mxu0 %v603
      %692 = vmatprep.subr.bf16.mxu0 %v608
      %693 = vmatpush1.bf16.msra.mxu0 %v607
      %694 = vmatprep.subr.bf16.mxu0 %v612
      %695 = vmatpush1.bf16.msra.mxu0 %v611
      %696 = vmatprep.subr.bf16.mxu0 0
      %697 = vmatpush1.bf16.msra.mxu0 0
      %698 = vmatprep.subr.bf16.mxu0 0
      %699 = vmatpush1.bf16.msra.mxu0 0
      %700 = vmatprep.subr.bf16.mxu0 0
      %701 = vmatpush1.bf16.msra.mxu0 0
      %702 = vmatprep.mubr.bf16.mxu0 %v627
      %703 = vmatmul.mubr.bf16.gmra.mrb[0].mxu0 %v622
      %v704 = vpop.f32.mrb[0].mxu0
      %v705 = vadd.f32 %v617, %v704
      %v706 = vpop.f32.mrb[0].mxu0
      %v707 = vadd.f32 %v617, %v706
      %v708 = vpop.f32.mrb[0].mxu0
      %v709 = vpop.f32.mrb[0].mxu0
      %710 = vdwg.mxu0
      %v711 = vmax.f32 %v664, 0.0
      %v712 = vmax.f32 %v666, 0.0
      %v713 = vmax.f32 %v705, 0.0
      %v714 = vmax.f32 %v707, 0.0
      %719 = vrot.lane.b32.xlu0 %v711, 127
      %v720 = vpop.permute.xlu0 %719
      %721 = vrot.lane.b32.xlu0 %v712, 127
      %v722 = vpop.permute.xlu0 %721
      %723 = vrot.lane.b32.xlu0 %v713, 127
      %v724 = vpop.permute.xlu0 %723
      %725 = vrot.lane.b32.xlu0 %v714, 127
      %v726 = vpop.permute.xlu0 %725
      %vm727 = vcmask 1039360
      %v728 = vsel %vm727, %v720, %v722
      %v729 = vsel %vm727, %v722, %v724
      %v730 = vsel %vm727, %v724, %v726
      %v735 = vmax.f32 %v711, %v728
      %v736 = vmax.f32 %v712, %v729
      %v737 = vmax.f32 %v713, %v730
      %v738 = vmax.f32 %v714, %v726
      %743 = vrot.lane.b32.xlu0 %v735, 112
      %v744 = vpop.permute.xlu0 %743
      %745 = vrot.lane.b32.xlu0 %v736, 112
      %v746 = vpop.permute.xlu0 %745
      %747 = vrot.lane.b32.xlu0 %v737, 112
      %v748 = vpop.permute.xlu0 %747
      %749 = vrot.lane.b32.xlu0 %v738, 112
      %v750 = vpop.permute.xlu0 %749
      %vm751 = vcmask 916480
      %v752 = vsel %vm751, %v744, %v746
      %v753 = vsel %vm751, %v746, %v748
      %v754 = vsel %vm751, %v748, %v750
      %v758 = vmax.f32 %v735, %v752
      %v759 = vmax.f32 %v736, %v753
      %v760 = vmax.f32 %v737, %v754
      %v761 = vpack.c.bf16 %v758, %v758
      %v762 = vpack.c.bf16 %v759, %v759
      %v763 = vpack.c.bf16 %v760, %v760
      %v767 = vunpack.c.l.b16 %v761
      %v768 = vunpack.c.l.b16 %v762
      %v769 = vunpack.c.l.b16 %v763
      %v770 = vpack.c.b16 %v768, %v767
      %v771 = vpack.c.b16 %v769, %v769
      %774 = vst [vmem:[%s230] sm:$0xff] %v770
      %775 = vst [vmem:[%s230 + $0x8] sm:$0xf] %v771
      %s776 = smul.u32 3, %s15
      %p777 = scmp.lt.s32.totalorder %s776, 5
      %s778 = scalar_select %p777, %s776, 5
      %s779 = smul.addr %s778, 4
      %s780 = scalar_lea.vmem %s4, %s779
      // Predicated region
      $region37: #{cnn_add_forward.3} parent=35 // pred_check
        %p781 = pneg %p131
      $region38: #{cnn_add_forward.3} parent=35 // pred_check_branch
        %783 = sbr.rel (%p781) target = $region40
      $region39: #{cnn_add_forward.3} parent=35 // pred_region
        %s784 = smul.u32 3, %s15
      $region40: #{cnn_add_forward.3} parent=35 // pred_fallthru
        _
    $region36: #{cnn_add_forward.3} parent=5 // pred_fallthru
      _
    %p785 = scmp.le.s32.totalorder 2, %s10
    // Predicated region
    $region41: #{cnn_add_forward.3} parent=5 // pred_check
      %p786 = pneg %p785
    $region42: #{cnn_add_forward.3} parent=5 // pred_check_branch
      %788 = sbr.rel (%p786) target = $region44
    $region43: #{cnn_add_forward.3} parent=5 // pred_region
      %s789 = ssub.s32 %s10, 2
      // Predicated region
      $region45: #{cnn_add_forward.3} parent=43 // pred_check
        %p790 = pneg %p137
      $region46: #{cnn_add_forward.3} parent=43 // pred_check_branch
        %792 = sbr.rel (%p790) target = $region48
      $region47: #{cnn_add_forward.3} parent=43 // pred_region
        %s793 = smul.u32 3, %s16
        %p794 = scmp.lt.s32.totalorder %s793, 5
        %s795 = scalar_select %p794, %s793, 5
        %s796 = smul.addr %s795, 4
        %s797 = scalar_lea.vmem %s4, %s796
      $region48: #{cnn_add_forward.3} parent=43 // pred_fallthru
        _
    $region44: #{cnn_add_forward.3} parent=5 // pred_fallthru
      _
  $region6: #{cnn_add_forward.3} parent=0 // loop_footer
    %s14 = sadd.s32 1, %s10
  $region7: #{cnn_add_forward.3} parent=0 // loop_footer_branch
    %9 = sbr.rel target = $region3
  $region8: #{cnn_add_forward.3} parent=0 // loop_exit
    _

// kernel: cnn_add_forward.5
$region0: #{cnn_add_forward.5}
  #allocation0 [shape = 'u32[]', space=smem, size = 0x4, offset = 0x4, fixed_abs, tag = 'smem constant byte address 0x4 - core index']
  #allocation1 [shape = 'u32[144,128]{1,0:T(1,128)}', space=vmem, size = 0x12000, scoped, tag = 'internal scratch']
  %s0 = inlined_call_operand.vmem [shape: bf16[8,128], index: 0, kind: input, shape index: {}]
  %s1 = inlined_call_operand.vmem [shape: bf16[128,128], index: 1, kind: input, shape index: {}]
  %s2 = inlined_call_operand.vmem [shape: f32[1,128], index: 2, kind: input, shape index: {}]
  %s3 = inlined_call_operand.vmem [shape: f32[1,128], index: 3, kind: input, shape index: {}]
  %s4 = inlined_call_operand.vmem [shape: f32[1,128], index: 4, kind: input, shape index: {}]
  %s5 = inlined_call_operand.vmem [shape: bf16[128,128], index: 5, kind: input, shape index: {}]
  %s6 = inlined_call_operand.vmem [shape: f32[1,128], index: 6, kind: input, shape index: {}]
  %s7 = inlined_call_operand.vmem [shape: f32[1,128], index: 7, kind: input, shape index: {}]
  %s8 = inlined_call_operand.vmem [shape: f32[1,128], index: 8, kind: input, shape index: {}]
  %s9 = inlined_call_operand.vmem [shape: bf16[128,128], index: 9, kind: input, shape index: {}]
  %s10 = inlined_call_operand.vmem [shape: f32[1,128], index: 10, kind: input, shape index: {}]
  %s11 = inlined_call_operand.vmem [shape: f32[8,128], index: 11, kind: output, shape index: {}]
  %s12 = sld [smem:[#allocation0]]
  $region54: #{cnn_add_forward.5} parent=0
    _
  %s14 = ssub.s32 1, %s12
  %s15 = scalar_select 0, %s14, %s12
  // Predicated region
  $region2: #{cnn_add_forward.5} parent=0 // pred_check
    _
  $region3: #{cnn_add_forward.5} parent=0 // pred_check_branch
    %17 = sbr.rel (0) target = $region5
  $region4: #{cnn_add_forward.5} parent=0 // pred_region
    _
  $region5: #{cnn_add_forward.5} parent=0 // pred_fallthru
    _
  // Predicated region
  $region6: #{cnn_add_forward.5} parent=0 // pred_check
    _
  $region7: #{cnn_add_forward.5} parent=0 // pred_check_branch
    %19 = sbr.rel (0) target = $region9
  $region8: #{cnn_add_forward.5} parent=0 // pred_region
    _
  $region9: #{cnn_add_forward.5} parent=0 // pred_fallthru
    _
  // Predicated region
  $region10: #{cnn_add_forward.5} parent=0 // pred_check
    _
  $region11: #{cnn_add_forward.5} parent=0 // pred_check_branch
    %21 = sbr.rel (0) target = $region13
  $region12: #{cnn_add_forward.5} parent=0 // pred_region
    _
  $region13: #{cnn_add_forward.5} parent=0 // pred_fallthru
    _
  // Predicated region
  $region14: #{cnn_add_forward.5} parent=0 // pred_check
    _
  $region15: #{cnn_add_forward.5} parent=0 // pred_check_branch
    %23 = sbr.rel (0) target = $region17
  $region16: #{cnn_add_forward.5} parent=0 // pred_region
    _
  $region17: #{cnn_add_forward.5} parent=0 // pred_fallthru
    _
  // Predicated region
  $region18: #{cnn_add_forward.5} parent=0 // pred_check
    _
  $region19: #{cnn_add_forward.5} parent=0 // pred_check_branch
    %25 = sbr.rel (0) target = $region21
  $region20: #{cnn_add_forward.5} parent=0 // pred_region
    _
  $region21: #{cnn_add_forward.5} parent=0 // pred_fallthru
    _
  // Predicated region
  $region22: #{cnn_add_forward.5} parent=0 // pred_check
    _
  $region23: #{cnn_add_forward.5} parent=0 // pred_check_branch
    %27 = sbr.rel (0) target = $region25
  $region24: #{cnn_add_forward.5} parent=0 // pred_region
    _
  $region25: #{cnn_add_forward.5} parent=0 // pred_fallthru
    _
  // Predicated region
  $region26: #{cnn_add_forward.5} parent=0 // pred_check
    _
  $region27: #{cnn_add_forward.5} parent=0 // pred_check_branch
    %29 = sbr.rel (0) target = $region29
  $region28: #{cnn_add_forward.5} parent=0 // pred_region
    _
  $region29: #{cnn_add_forward.5} parent=0 // pred_fallthru
    _
  // Predicated region
  $region30: #{cnn_add_forward.5} parent=0 // pred_check
    _
  $region31: #{cnn_add_forward.5} parent=0 // pred_check_branch
    %31 = sbr.rel (0) target = $region33
  $region32: #{cnn_add_forward.5} parent=0 // pred_region
    _
  $region33: #{cnn_add_forward.5} parent=0 // pred_fallthru
    _
  // Predicated region
  $region34: #{cnn_add_forward.5} parent=0 // pred_check
    _
  $region35: #{cnn_add_forward.5} parent=0 // pred_check_branch
    %33 = sbr.rel (0) target = $region37
  $region36: #{cnn_add_forward.5} parent=0 // pred_region
    _
  $region37: #{cnn_add_forward.5} parent=0 // pred_fallthru
    _
  // Predicated region
  $region38: #{cnn_add_forward.5} parent=0 // pred_check
    _
  $region39: #{cnn_add_forward.5} parent=0 // pred_check_branch
    %35 = sbr.rel (0) target = $region41
  $region40: #{cnn_add_forward.5} parent=0 // pred_region
    _
  $region41: #{cnn_add_forward.5} parent=0 // pred_fallthru
    _
  // Predicated region
  $region42: #{cnn_add_forward.5} parent=0 // pred_check
    _
  $region43: #{cnn_add_forward.5} parent=0 // pred_check_branch
    %37 = sbr.rel (0) target = $region45
  $region44: #{cnn_add_forward.5} parent=0 // pred_region
    _
  $region45: #{cnn_add_forward.5} parent=0 // pred_fallthru
    _
  %v39 = vld [vmem:[%s0] sm:$0xf]
  %v40 = vld [vmem:[%s1] sm:$0xf]
  %v41 = vld [vmem:[%s1 + $0x4] sm:$0xf]
  %v42 = vld [vmem:[%s1 + $0x8] sm:$0xf]
  %v43 = vld [vmem:[%s1 + $0xc] sm:$0xf]
  %v44 = vld [vmem:[%s1 + $0x10] sm:$0xf]
  %v45 = vld [vmem:[%s1 + $0x14] sm:$0xf]
  %v46 = vld [vmem:[%s1 + $0x18] sm:$0xf]
  %v47 = vld [vmem:[%s1 + $0x1c] sm:$0xf]
  %v48 = vld [vmem:[%s1 + $0x20] sm:$0xf]
  %v49 = vld [vmem:[%s1 + $0x24] sm:$0xf]
  %v50 = vld [vmem:[%s1 + $0x28] sm:$0xf]
  %v51 = vld [vmem:[%s1 + $0x2c] sm:$0xf]
  %v52 = vld [vmem:[%s1 + $0x30] sm:$0xf]
  %v53 = vld [vmem:[%s1 + $0x34] sm:$0xf]
  %v54 = vld [vmem:[%s1 + $0x38] sm:$0xf]
  %v55 = vld [vmem:[%s1 + $0x3c] sm:$0xf]
  %v56 = vld [vmem:[%s2] sm:$0x1]
  %v58 = vlaneseq
  %v59 = vshrl.u32 %v58, 7
  %v60 = vsub.s32 0, %v59
  %v61 = vrot.slane %v56, %v60
  %v79 = vunpack.c.l.b16 %v40
  %v80 = vunpack.c.l.b16 %v41
  %v81 = vunpack.c.l.b16 %v42
  %v82 = vunpack.c.l.b16 %v43
  %v83 = vunpack.c.l.b16 %v44
  %v84 = vunpack.c.l.b16 %v45
  %v85 = vunpack.c.l.b16 %v46
  %v86 = vunpack.c.l.b16 %v47
  %v87 = vunpack.c.l.b16 %v48
  %v88 = vunpack.c.l.b16 %v49
  %v89 = vunpack.c.l.b16 %v50
  %v90 = vunpack.c.l.b16 %v51
  %v91 = vunpack.c.l.b16 %v52
  %v92 = vunpack.c.l.b16 %v53
  %v93 = vunpack.c.l.b16 %v54
  %v94 = vunpack.c.l.b16 %v55
  %v95 = vpack.c.b16 %v80, %v79
  %v96 = vpack.c.b16 %v82, %v81
  %v97 = vpack.c.b16 %v84, %v83
  %v98 = vpack.c.b16 %v86, %v85
  %v99 = vpack.c.b16 %v88, %v87
  %v100 = vpack.c.b16 %v90, %v89
  %v101 = vpack.c.b16 %v92, %v91
  %v102 = vpack.c.b16 %v94, %v93
  %111 = vmatprep.subr.bf16.mxu0 0
  %112 = vmatpush1.bf16.msra.mxu0 %v95
  %113 = vmatprep.subr.bf16.mxu0 0
  %114 = vmatpush1.bf16.msra.mxu0 %v96
  %115 = vmatprep.subr.bf16.mxu0 0
  %116 = vmatpush1.bf16.msra.mxu0 %v97
  %117 = vmatprep.subr.bf16.mxu0 0
  %118 = vmatpush1.bf16.msra.mxu0 %v98
  %119 = vmatprep.subr.bf16.mxu0 0
  %120 = vmatpush1.bf16.msra.mxu0 %v99
  %121 = vmatprep.subr.bf16.mxu0 0
  %122 = vmatpush1.bf16.msra.mxu0 %v100
  %123 = vmatprep.subr.bf16.mxu0 0
  %124 = vmatpush1.bf16.msra.mxu0 %v101
  %125 = vmatprep.subr.bf16.mxu0 0
  %126 = vmatpush1.bf16.msra.mxu0 %v102
  %127 = vmatprep.subr.bf16.mxu0 0
  %128 = vmatpush1.bf16.msra.mxu0 0
  %129 = vmatprep.subr.bf16.mxu0 0
  %130 = vmatpush1.bf16.msra.mxu0 0
  %131 = vmatprep.subr.bf16.mxu0 0
  %132 = vmatpush1.bf16.msra.mxu0 0
  %133 = vmatprep.subr.bf16.mxu0 0
  %134 = vmatpush1.bf16.msra.mxu0 0
  %135 = vmatprep.subr.bf16.mxu0 0
  %136 = vmatpush1.bf16.msra.mxu0 0
  %137 = vmatprep.subr.bf16.mxu0 0
  %138 = vmatpush1.bf16.msra.mxu0 0
  %139 = vmatprep.subr.bf16.mxu0 0
  %140 = vmatpush1.bf16.msra.mxu0 0
  %141 = vmatprep.subr.bf16.mxu0 0
  %142 = vmatpush1.bf16.msra.mxu0 0
  %143 = vmatprep.mubr.bf16.mxu0 0
  %144 = vmatmul.mubr.bf16.gmra.mrb[0].mxu0 %v39
  %v145 = vpop.f32.mrb[0].mxu0
  %v146 = vadd.f32 %v61, %v145
  %v147 = vpop.f32.mrb[0].mxu0
  %v148 = vpop.f32.mrb[0].mxu0
  %v149 = vpop.f32.mrb[0].mxu0
  %150 = vdwg.mxu0
  %v151 = vmax.f32 %v146, 0.0
  %v152 = vld [vmem:[%s3] sm:$0x1]
  %v154 = vlaneseq
  %v155 = vshrl.u32 %v154, 7
  %v156 = vsub.s32 0, %v155
  %v157 = vrot.slane %v152, %v156
  %v159 = vmul.f32 %v151, %v157
  %v160 = vld [vmem:[%s4] sm:$0x1]
  %v162 = vlaneseq
  %v163 = vshrl.u32 %v162, 7
  %v164 = vsub.s32 0, %v163
  %v165 = vrot.slane %v160, %v164
  %v167 = vadd.f32 %v159, %v165
  %v168 = vpack.c.bf16 %v167, %v167
  %v169 = vld [vmem:[%s5] sm:$0xf]
  %v170 = vld [vmem:[%s5 + $0x4] sm:$0xf]
  %v171 = vld [vmem:[%s5 + $0x8] sm:$0xf]
  %v172 = vld [vmem:[%s5 + $0xc] sm:$0xf]
  %v173 = vld [vmem:[%s5 + $0x10] sm:$0xf]
  %v174 = vld [vmem:[%s5 + $0x14] sm:$0xf]
  %v175 = vld [vmem:[%s5 + $0x18] sm:$0xf]
  %v176 = vld [vmem:[%s5 + $0x1c] sm:$0xf]
  %v177 = vld [vmem:[%s5 + $0x20] sm:$0xf]
  %v178 = vld [vmem:[%s5 + $0x24] sm:$0xf]
  %v179 = vld [vmem:[%s5 + $0x28] sm:$0xf]
  %v180 = vld [vmem:[%s5 + $0x2c] sm:$0xf]
  %v181 = vld [vmem:[%s5 + $0x30] sm:$0xf]
  %v182 = vld [vmem:[%s5 + $0x34] sm:$0xf]
  %v183 = vld [vmem:[%s5 + $0x38] sm:$0xf]
  %v184 = vld [vmem:[%s5 + $0x3c] sm:$0xf]
  %v185 = vld [vmem:[%s6] sm:$0x1]
  %v187 = vlaneseq
  %v188 = vshrl.u32 %v187, 7
  %v189 = vsub.s32 0, %v188
  %v190 = vrot.slane %v185, %v189
  %v208 = vunpack.c.l.b16 %v169
  %v209 = vunpack.c.l.b16 %v170
  %v210 = vunpack.c.l.b16 %v171
  %v211 = vunpack.c.l.b16 %v172
  %v212 = vunpack.c.l.b16 %v173
  %v213 = vunpack.c.l.b16 %v174
  %v214 = vunpack.c.l.b16 %v175
  %v215 = vunpack.c.l.b16 %v176
  %v216 = vunpack.c.l.b16 %v177
  %v217 = vunpack.c.l.b16 %v178
  %v218 = vunpack.c.l.b16 %v179
  %v219 = vunpack.c.l.b16 %v180
  %v220 = vunpack.c.l.b16 %v181
  %v221 = vunpack.c.l.b16 %v182
  %v222 = vunpack.c.l.b16 %v183
  %v223 = vunpack.c.l.b16 %v184
  %v224 = vpack.c.b16 %v209, %v208
  %v225 = vpack.c.b16 %v211, %v210
  %v226 = vpack.c.b16 %v213, %v212
  %v227 = vpack.c.b16 %v215, %v214
  %v228 = vpack.c.b16 %v217, %v216
  %v229 = vpack.c.b16 %v219, %v218
  %v230 = vpack.c.b16 %v221, %v220
  %v231 = vpack.c.b16 %v223, %v222
  %240 = vmatprep.subr.bf16.mxu0 0
  %241 = vmatpush1.bf16.msra.mxu0 %v224
  %242 = vmatprep.subr.bf16.mxu0 0
  %243 = vmatpush1.bf16.msra.mxu0 %v225
  %244 = vmatprep.subr.bf16.mxu0 0
  %245 = vmatpush1.bf16.msra.mxu0 %v226
  %246 = vmatprep.subr.bf16.mxu0 0
  %247 = vmatpush1.bf16.msra.mxu0 %v227
  %248 = vmatprep.subr.bf16.mxu0 0
  %249 = vmatpush1.bf16.msra.mxu0 %v228
  %250 = vmatprep.subr.bf16.mxu0 0
  %251 = vmatpush1.bf16.msra.mxu0 %v229
  %252 = vmatprep.subr.bf16.mxu0 0
  %253 = vmatpush1.bf16.msra.mxu0 %v230
  %254 = vmatprep.subr.bf16.mxu0 0
  %255 = vmatpush1.bf16.msra.mxu0 %v231
  %256 = vmatprep.subr.bf16.mxu0 0
  %257 = vmatpush1.bf16.msra.mxu0 0
  %258 = vmatprep.subr.bf16.mxu0 0
  %259 = vmatpush1.bf16.msra.mxu0 0
  %260 = vmatprep.subr.bf16.mxu0 0
  %261 = vmatpush1.bf16.msra.mxu0 0
  %262 = vmatprep.subr.bf16.mxu0 0
  %263 = vmatpush1.bf16.msra.mxu0 0
  %264 = vmatprep.subr.bf16.mxu0 0
  %265 = vmatpush1.bf16.msra.mxu0 0
  %266 = vmatprep.subr.bf16.mxu0 0
  %267 = vmatpush1.bf16.msra.mxu0 0
  %268 = vmatprep.subr.bf16.mxu0 0
  %269 = vmatpush1.bf16.msra.mxu0 0
  %270 = vmatprep.subr.bf16.mxu0 0
  %271 = vmatpush1.bf16.msra.mxu0 0
  %272 = vmatprep.mubr.bf16.mxu0 0
  %273 = vmatmul.mubr.bf16.gmra.mrb[0].mxu0 %v168
  %v274 = vpop.f32.mrb[0].mxu0
  %v275 = vadd.f32 %v190, %v274
  %v276 = vpop.f32.mrb[0].mxu0
  %v277 = vpop.f32.mrb[0].mxu0
  %v278 = vpop.f32.mrb[0].mxu0
  %279 = vdwg.mxu0
  %v280 = vmax.f32 %v275, 0.0
  %v281 = vld [vmem:[%s7] sm:$0x1]
  %v283 = vlaneseq
  %v284 = vshrl.u32 %v283, 7
  %v285 = vsub.s32 0, %v284
  %v286 = vrot.slane %v281, %v285
  %v288 = vmul.f32 %v280, %v286
  %v289 = vld [vmem:[%s8] sm:$0x1]
  %v291 = vlaneseq
  %v292 = vshrl.u32 %v291, 7
  %v293 = vsub.s32 0, %v292
  %v294 = vrot.slane %v289, %v293
  %v296 = vadd.f32 %v288, %v294
  %v297 = vpack.c.bf16 %v296, %v296
  %v298 = vld [vmem:[%s9] sm:$0xf]
  %v299 = vld [vmem:[%s9 + $0x4] sm:$0xf]
  %v300 = vld [vmem:[%s9 + $0x8] sm:$0xf]
  %v301 = vld [vmem:[%s9 + $0xc] sm:$0xf]
  %v302 = vld [vmem:[%s9 + $0x10] sm:$0xf]
  %v303 = vld [vmem:[%s9 + $0x14] sm:$0xf]
  %v304 = vld [vmem:[%s9 + $0x18] sm:$0xf]
  %v305 = vld [vmem:[%s9 + $0x1c] sm:$0xf]
  %v306 = vld [vmem:[%s9 + $0x20] sm:$0xf]
  %v307 = vld [vmem:[%s9 + $0x24] sm:$0xf]
  %v308 = vld [vmem:[%s9 + $0x28] sm:$0xf]
  %v309 = vld [vmem:[%s9 + $0x2c] sm:$0xf]
  %v310 = vld [vmem:[%s9 + $0x30] sm:$0xf]
  %v311 = vld [vmem:[%s9 + $0x34] sm:$0xf]
  %v312 = vld [vmem:[%s9 + $0x38] sm:$0xf]
  %v313 = vld [vmem:[%s9 + $0x3c] sm:$0xf]
  %v314 = vld [vmem:[%s10] sm:$0x1]
  %v316 = vlaneseq
  %v317 = vshrl.u32 %v316, 7
  %v318 = vsub.s32 0, %v317
  %v319 = vrot.slane %v314, %v318
  %v337 = vunpack.c.l.b16 %v298
  %v338 = vunpack.c.l.b16 %v299
  %v339 = vunpack.c.l.b16 %v300
  %v340 = vunpack.c.l.b16 %v301
  %v341 = vunpack.c.l.b16 %v302
  %v342 = vunpack.c.l.b16 %v303
  %v343 = vunpack.c.l.b16 %v304
  %v344 = vunpack.c.l.b16 %v305
  %v345 = vunpack.c.l.b16 %v306
  %v346 = vunpack.c.l.b16 %v307
  %v347 = vunpack.c.l.b16 %v308
  %v348 = vunpack.c.l.b16 %v309
  %v349 = vunpack.c.l.b16 %v310
  %v350 = vunpack.c.l.b16 %v311
  %v351 = vunpack.c.l.b16 %v312
  %v352 = vunpack.c.l.b16 %v313
  %v353 = vpack.c.b16 %v338, %v337
  %v354 = vpack.c.b16 %v340, %v339
  %v355 = vpack.c.b16 %v342, %v341
  %v356 = vpack.c.b16 %v344, %v343
  %v357 = vpack.c.b16 %v346, %v345
  %v358 = vpack.c.b16 %v348, %v347
  %v359 = vpack.c.b16 %v350, %v349
  %v360 = vpack.c.b16 %v352, %v351
  %369 = vmatprep.subr.bf16.mxu0 0
  %370 = vmatpush1.bf16.msra.mxu0 %v353
  %371 = vmatprep.subr.bf16.mxu0 0
  %372 = vmatpush1.bf16.msra.mxu0 %v354
  %373 = vmatprep.subr.bf16.mxu0 0
  %374 = vmatpush1.bf16.msra.mxu0 %v355
  %375 = vmatprep.subr.bf16.mxu0 0
  %376 = vmatpush1.bf16.msra.mxu0 %v356
  %377 = vmatprep.subr.bf16.mxu0 0
  %378 = vmatpush1.bf16.msra.mxu0 %v357
  %379 = vmatprep.subr.bf16.mxu0 0
  %380 = vmatpush1.bf16.msra.mxu0 %v358
  %381 = vmatprep.subr.bf16.mxu0 0
  %382 = vmatpush1.bf16.msra.mxu0 %v359
  %383 = vmatprep.subr.bf16.mxu0 0
  %384 = vmatpush1.bf16.msra.mxu0 %v360
  %385 = vmatprep.subr.bf16.mxu0 0
  %386 = vmatpush1.bf16.msra.mxu0 0
  %387 = vmatprep.subr.bf16.mxu0 0
  %388 = vmatpush1.bf16.msra.mxu0 0
  %389 = vmatprep.subr.bf16.mxu0 0
  %390 = vmatpush1.bf16.msra.mxu0 0
  %391 = vmatprep.subr.bf16.mxu0 0
  %392 = vmatpush1.bf16.msra.mxu0 0
  %393 = vmatprep.subr.bf16.mxu0 0
  %394 = vmatpush1.bf16.msra.mxu0 0
  %395 = vmatprep.subr.bf16.mxu0 0
  %396 = vmatpush1.bf16.msra.mxu0 0
  %397 = vmatprep.subr.bf16.mxu0 0
  %398 = vmatpush1.bf16.msra.mxu0 0
  %399 = vmatprep.subr.bf16.mxu0 0
  %400 = vmatpush1.bf16.msra.mxu0 0
  %401 = vmatprep.mubr.bf16.mxu0 0
  %402 = vmatmul.mubr.bf16.gmra.mrb[0].mxu0 %v297
  %v403 = vpop.f32.mrb[0].mxu0
  %v404 = vadd.f32 %v319, %v403
  %v405 = vpop.f32.mrb[0].mxu0
  %v406 = vpop.f32.mrb[0].mxu0
  %v407 = vpop.f32.mrb[0].mxu0
  %408 = vdwg.mxu0
  %409 = vst [vmem:[%s11] sm:$0xff] %v404
  // Predicated region
  $region46: #{cnn_add_forward.5} parent=0 // pred_check
    _
  $region47: #{cnn_add_forward.5} parent=0 // pred_check_branch
    %411 = sbr.rel (0) target = $region49
  $region48: #{cnn_add_forward.5} parent=0 // pred_region
    _
  $region49: #{cnn_add_forward.5} parent=0 // pred_fallthru
    _
  // Predicated region
  $region50: #{cnn_add_forward.5} parent=0 // pred_check
    _
  $region51: #{cnn_add_forward.5} parent=0 // pred_check_branch
    %413 = sbr.rel (0) target = $region53
  $region52: #{cnn_add_forward.5} parent=0 // pred_region
    _
  $region53: #{cnn_add_forward.5} parent=0 // pred_fallthru
    _

</llo_original>
